<compile_context>
chip_gen: v7x
topology: tpu7x:2x2x1
jax: 0.10.0
libtpu: 0.0.40
codegen_flags: <defaults>
</compile_context>

<pallas_src>
import math
import functools

import jax
import jax.numpy as jnp
from jax.experimental import pallas as pl
from jax.experimental.pallas import tpu as pltpu


def _rup(v, m):
    return -(-v // m) * m


def _vmem_bytes(shape, dtype):
    """Rough VMEM footprint of one buffer in Mosaic's tiled layout."""
    itemsize = jnp.dtype(dtype).itemsize
    sub = max(8, 8 * (4 // itemsize))          # sublane tile: f32->8, bf16->16
    dims = list(shape)
    dims[-1] = _rup(dims[-1], 128)
    if len(dims) >= 2:
        dims[-2] = _rup(dims[-2], sub)
    n = 1
    for d in dims:
        n *= d
    return n * itemsize


def _eqconv_kernel_folded(x_ref, w_ref, b_ref, o_ref, patch_ref, *, ks, th, wo, ci):
    """Small-C_in path: per-tile im2col in VMEM, single MXU dot (K = ks*ks*ci)."""
    # x_ref:     (rows_in, Wp, Ci)   one overlapping row slab (halo included)
    # w_ref:     (ks*ks*Ci, tco)     resident, equalized-lr scale pre-folded
    # b_ref:     (1, tco)            f32 bias row
    # o_ref:     (th*wo, tco)
    # patch_ref: (th, wo, ks*ks*Ci)  VMEM scratch (per-tile im2col)
    for kh in range(ks):                      # static -> fully unrolled
        for kw in range(ks):
            lo = (kh * ks + kw) * ci
            patch_ref[:, :, lo:lo + ci] = x_ref[kh:kh + th, kw:kw + wo, :]
    lhs = patch_ref[...].reshape(th * wo, ks * ks * ci)
    acc = jnp.dot(lhs, w_ref[...], preferred_element_type=jnp.float32)
    o_ref[...] = (acc + b_ref[...].astype(jnp.float32)).astype(o_ref.dtype)


def _eqconv_kernel_taps(x_ref, w_ref, b_ref, o_ref, acc_ref, *, ks, th, wo):
    """Large-C_in path: one dot per tap (K = Ci >= 128), VMEM f32 accumulator."""
    # x_ref: (rows_in, Wp, Ci); w_ref: (ks, ks, Ci, tco); acc_ref: (th*wo, tco) f32
    ci = x_ref.shape[-1]
    for kh in range(ks):
        for kw in range(ks):
            lhs = x_ref[kh:kh + th, kw:kw + wo, :].reshape(th * wo, ci)
            part = jnp.dot(lhs, w_ref[kh, kw], preferred_element_type=jnp.float32)
            if kh == 0 and kw == 0:
                acc_ref[...] = part
            else:
                acc_ref[...] += part
    o_ref[...] = (acc_ref[...] + b_ref[...].astype(jnp.float32)).astype(o_ref.dtype)


def equalized_conv(x, weight, bias, *, stride, pad,
                   compute_dtype=jnp.bfloat16, th=None, tco=None,
                   vmem_limit_bytes=None):
    """F.conv2d(x, weight * scale, bias, stride, pad), scale = sqrt(2/(ci*ks*ks)).

    x:      (N, C_in, H, W)       NCHW (PyTorch convention)
    weight: (C_out, C_in, ks, ks)
    bias:   (C_out,) or None
    returns (N, C_out, H_out, W_out)
    """
    n, ci, h, w = x.shape
    co, ci_w, ks, ks2 = weight.shape
    assert ci == ci_w and ks == ks2
    s = int(stride)
    scale = math.sqrt(2.0 / (ci * ks * ks))
    out_dtype = x.dtype
    itemsize = jnp.dtype(compute_dtype).itemsize
    out_itemsize = jnp.dtype(out_dtype).itemsize

    h_out = (h + 2 * pad - ks) // s + 1
    w_out = (w + 2 * pad - ks) // s + 1
    assert h_out > 0 and w_out > 0

    # ---- wrapper glue: NCHW -> NHWC + spatial zero pad ----
    x_p = jnp.pad(jnp.transpose(x, (0, 2, 3, 1)),
                  ((0, 0), (pad, pad), (pad, pad), (0, 0)))
    hp, wp = h + 2 * pad, w + 2 * pad
    # weight (co, ci, kh, kw) -> (kh, kw, ci, co); equalized-lr scale folded ONCE
    w_e = jnp.transpose(weight, (2, 3, 1, 0)).astype(jnp.float32) * scale

    # ---- stride > 1: space-to-depth so the kernel only ever runs stride 1 ----
    if s > 1:
        ks_e = -(-ks // s)
        hp_e, wp_e = -(-hp // s), -(-wp // s)
        x_p = jnp.pad(x_p, ((0, 0), (0, hp_e * s - hp), (0, wp_e * s - wp), (0, 0)))
        x_p = x_p.reshape(n, hp_e, s, wp_e, s, ci)
        x_p = jnp.transpose(x_p, (0, 1, 3, 2, 4, 5)).reshape(n, hp_e, wp_e, s * s * ci)
        w_e = jnp.pad(w_e, ((0, ks_e * s - ks), (0, ks_e * s - ks), (0, 0), (0, 0)))
        w_e = w_e.reshape(ks_e, s, ks_e, s, ci, co)
        w_e = jnp.transpose(w_e, (0, 2, 1, 3, 4, 5)).reshape(ks_e, ks_e, s * s * ci, co)
        ci_e = s * s * ci
    else:
        ks_e, hp_e, wp_e, ci_e = ks, hp, wp, ci

    # ---- output-channel tiling: keep the full weight resident when it fits ----
    co_pad = _rup(co, 128)                          # lane-dense output stores
    if tco is None:
        if ks_e * ks_e * ci_e * co_pad * itemsize <= (6 << 20):
            tco = co_pad                            # input streamed exactly once
        else:
            tco = 256 if co_pad % 256 == 0 else 128
    tco = min(int(tco), co_pad)
    assert co_pad % tco == 0
    nc = co_pad // tco

    # ---- output-row tiling (budgeted against the *padded* VMEM layout) ----
    if th is None:
        sub = max(8, 8 * (4 // itemsize))
        row_bytes = _rup(wp_e, sub) * _rup(ci_e, 128) * itemsize
        per_row = w_out * tco * (4 + 2 * out_itemsize)        # acc + 2 out buffers
        th = -(-1024 // w_out)                                # ~1024 matmul rows/step
        th = min(th,
                 max(1, (3 << 20) // row_bytes - (ks_e - 1)),  # 2 slab buffers <= 6 MiB
                 max(1, (6 << 20) // per_row))
    th = max(min(int(th), h_out), ks_e - 1, 1)
    rows_in = th + ks_e - 1
    nt = -(-h_out // th)
    flat_rows = th * w_out

    # ---- overlapping row slabs: only ks_e-1 halo rows are duplicated ----
    hp_need = (nt + 1) * th if ks_e > 1 else nt * th
    hp_need = max(hp_need, nt * th + ks_e - 1)
    if hp_need > hp_e:
        x_p = jnp.pad(x_p, ((0, 0), (0, hp_need - hp_e), (0, 0), (0, 0)))
    x_p = x_p.astype(compute_dtype)
    main = x_p[:, :nt * th].reshape(n, nt, th, wp_e, ci_e)
    if ks_e > 1:
        halo = x_p[:, th:(nt + 1) * th].reshape(n, nt, th, wp_e, ci_e)[:, :, :ks_e - 1]
        slabs = jnp.concatenate([main, halo], axis=2)
    else:
        slabs = main
    x_slabs = slabs.reshape(n * nt, rows_in, wp_e, ci_e)

    if bias is None:
        b_row = jnp.zeros((1, co_pad), jnp.float32)
    else:
        b_row = jnp.pad(bias.astype(jnp.float32).reshape(1, co),
                        ((0, 0), (0, co_pad - co)))

    fold_taps = ci_e < 128      # contraction-starved MXU -> per-tile im2col in VMEM
    if fold_taps:
        kf = ks_e * ks_e * ci_e
        w_k = jnp.pad(w_e.reshape(kf, co),
                      ((0, 0), (0, co_pad - co))).astype(compute_dtype)
        w_spec = pl.BlockSpec((kf, tco), lambda b, c, t: (0, c))
        scratch = [pltpu.VMEM((th, w_out, kf), compute_dtype)]
        kernel = functools.partial(_eqconv_kernel_folded,
                                   ks=ks_e, th=th, wo=w_out, ci=ci_e)
        scratch_bytes = _vmem_bytes((th, w_out, kf), compute_dtype)
        w_block_bytes = _vmem_bytes((kf, tco), compute_dtype)
    else:
        w_k = jnp.pad(w_e, ((0, 0), (0, 0), (0, 0),
                            (0, co_pad - co))).astype(compute_dtype)
        w_spec = pl.BlockSpec((ks_e, ks_e, ci_e, tco), lambda b, c, t: (0, 0, 0, c))
        scratch = [pltpu.VMEM((flat_rows, tco), jnp.float32)]
        kernel = functools.partial(_eqconv_kernel_taps, ks=ks_e, th=th, wo=w_out)
        scratch_bytes = _vmem_bytes((flat_rows, tco), jnp.float32)
        w_block_bytes = ks_e * ks_e * _vmem_bytes((ci_e, tco), compute_dtype)

    cost = pl.CostEstimate(
        flops=2 * n * h_out * w_out * co * ci * ks * ks,
        transcendentals=0,
        bytes_accessed=int(nc * x_slabs.size * itemsize          # 1 stream per co tile
                           + (n * nc if nc > 1 else 1) * w_k.size * itemsize
                           + b_row.size * 4
                           + n * nt * flat_rows * co_pad * out_itemsize))

    cp_kwargs = dict(dimension_semantics=("parallel", "parallel", "parallel"))
    vmem_est = (2 * _vmem_bytes((rows_in, wp_e, ci_e), compute_dtype)
                + 2 * _vmem_bytes((flat_rows, tco), out_dtype)
                + 2 * w_block_bytes + scratch_bytes
                + _vmem_bytes((1, tco), jnp.float32))
    if vmem_limit_bytes is None and vmem_est > (12 << 20):
        vmem_limit_bytes = min(48 << 20, max(32 << 20, 2 * vmem_est))
    if vmem_limit_bytes is not None:
        cp_kwargs["vmem_limit_bytes"] = int(vmem_limit_bytes)

    out_flat = pl.pallas_call(
        kernel,
        out_shape=jax.ShapeDtypeStruct((n * nt, flat_rows, co_pad), out_dtype),
        grid_spec=pltpu.PrefetchScalarGridSpec(
            num_scalar_prefetch=0,
            grid=(n, nc, nt),
            in_specs=[
                # one overlapping row slab per (batch, h-tile); halo already inside
                pl.BlockSpec((None, rows_in, wp_e, ci_e),
                             lambda b, c, t: (b * nt + t, 0, 0, 0)),
                w_spec,
                pl.BlockSpec((1, tco), lambda b, c, t: (0, c)),
            ],
            out_specs=pl.BlockSpec((None, flat_rows, tco),
                                   lambda b, c, t: (b * nt + t, 0, c)),
            scratch_shapes=scratch,
        ),
        compiler_params=pltpu.CompilerParams(**cp_kwargs),
        cost_estimate=cost,
    )(x_slabs, w_k, b_row)

    out = out_flat.reshape(n, nt * th, w_out, co_pad)[:, :h_out, :, :co]
    return jnp.transpose(out, (0, 3, 1, 2))                  # back to NCHW


# --------------------------- self test ---------------------------

def _ref_conv(x, weight, bias, stride, pad):
    ci, ks = weight.shape[1], weight.shape[2]
    scale = math.sqrt(2.0 / (ci * ks * ks))
    xq = x.astype(jnp.bfloat16).astype(jnp.float32)
    wq = (weight.astype(jnp.float32) * scale).astype(jnp.bfloat16).astype(jnp.float32)
    out = jax.lax.conv_general_dilated(
        xq, wq, window_strides=(stride, stride),
        padding=[(pad, pad), (pad, pad)],
        dimension_numbers=("NCHW", "OIHW", "NCHW"))
    if bias is not None:
        out = out + bias.astype(jnp.float32).reshape(1, -1, 1, 1)
    return out


def _check(name, x, weight, bias, stride, pad, **kw):
    out = equalized_conv(x, weight, bias, stride=stride, pad=pad, **kw)
    jax.block_until_ready(out)
    ref = _ref_conv(x, weight, bias, stride, pad)
    assert out.shape == ref.shape, (name, out.shape, ref.shape)
    err = float(jnp.max(jnp.abs(out - ref)))
    assert jnp.allclose(out, ref, atol=1e-2, rtol=1e-2), (name, err)
    return out


if __name__ == "__main__":
    key = jax.random.PRNGKey(0)
    k1, k2, k3, k4, k5, k6, k7, k8 = jax.random.split(key, 8)

    # module config: EqualizedConv(ni=4, no=8, ks=3, stride=1, pad=1, use_bias=True)
    ni, no, ks, stride, pad = 4, 8, 3, 1, 1
    n, h, w = 2, 16, 16
    x = jax.random.normal(k1, (n, ni, h, w), dtype=jnp.float32)
    weight = jax.random.normal(k2, (no, ni, ks, ks), dtype=jnp.float32)  # nn.init.normal_
    bias = jnp.zeros((no,), dtype=jnp.float32)                           # .fill_(0)

    out = _check("base", x, weight, bias, stride, pad)       # folded small-Ci path
    _check("multi_tile", x, weight, bias, stride, pad, th=5)  # nt>1, halo rows, tail pad

    # stride=2 (space-to-depth path) with C_out not a multiple of 128
    x2 = jax.random.normal(k3, (2, 4, 16, 16), dtype=jnp.float32)
    w2 = jax.random.normal(k4, (3, 4, 3, 3), dtype=jnp.float32)
    b2 = jax.random.normal(k5, (3,), dtype=jnp.float32)
    _check("stride2_co3", x2, w2, b2, 2, 1)

    # large C_in (>=128): per-tap dots with VMEM f32 accumulator
    x3 = jax.random.normal(k6, (1, 128, 8, 8), dtype=jnp.float32)
    w3 = jax.random.normal(k7, (16, 128, 3, 3), dtype=jnp.float32) * 0.1
    _check("ci128_taps", x3, w3, None, 1, 1)

    # C_out tiling path (tco < co_pad)
    x4 = jax.random.normal(k8, (1, 8, 8, 8), dtype=jnp.float32)
    w4 = jax.random.normal(k2, (160, 8, 3, 3), dtype=jnp.float32) * 0.2
    _check("co_tiled", x4, w4, None, 1, 1, tco=128)

    jax.block_until_ready(out)
    print("KERNEL_OK")
</pallas_src>

<mosaic_0001>
module attributes {stable_mosaic.version = 11 : i64} {
  func.func @_eqconv_kernel_folded(%arg0: i32, %arg1: i32, %arg2: i32, %arg3: memref<1x18x18x4xbf16, #tpu.memory_space<vmem>>, %arg4: memref<36x128xbf16, #tpu.memory_space<vmem>>, %arg5: memref<1x128xf32, #tpu.memory_space<vmem>>, %arg6: memref<1x256x128xf32, #tpu.memory_space<vmem>>, %arg7: memref<16x16x36xbf16, #tpu.memory_space<vmem>>) attributes {dimension_semantics = [#tpu.dimension_semantics<parallel>, #tpu.dimension_semantics<parallel>, #tpu.dimension_semantics<parallel>], iteration_bounds = array<i64: 2, 1, 1>, scalar_prefetch = 0 : i64, scratch_operands = 1 : i64, tpu.core_type = #tpu.core_type<tc>, window_params = [{transform_indices = @transform_0, window_bounds = array<i64: 1, 18, 18, 4>}, {transform_indices = @transform_1, window_bounds = array<i64: 36, 128>}, {transform_indices = @transform_2, window_bounds = array<i64: 1, 128>}, {transform_indices = @transform_3, window_bounds = array<i64: 1, 256, 128>}]} {
    %c0 = arith.constant 0 : index
    %c0_0 = arith.constant 0 : index
    %c0_1 = arith.constant 0 : index
    %c0_2 = arith.constant 0 : index
    %0 = vector.load %arg3[%c0, %c0_0, %c0_1, %c0_2] : memref<1x18x18x4xbf16, #tpu.memory_space<vmem>>, vector<1x16x16x4xbf16>
    %1 = vector.shape_cast %0 : vector<1x16x16x4xbf16> to vector<16x16x4xbf16>
    %c0_3 = arith.constant 0 : index
    %c0_4 = arith.constant 0 : index
    %c0_5 = arith.constant 0 : index
    %2 = vector.load %arg7[%c0_3, %c0_4, %c0_5] : memref<16x16x36xbf16, #tpu.memory_space<vmem>>, vector<16x16x4xbf16>
    tpu.vector_store %arg7[%c0_3, %c0_4, %c0_5], %1 {strides = array<i32>} : memref<16x16x36xbf16, #tpu.memory_space<vmem>>, vector<16x16x4xbf16>,
    %c0_6 = arith.constant 0 : index
    %c0_7 = arith.constant 0 : index
    %c1 = arith.constant 1 : index
    %c0_8 = arith.constant 0 : index
    %3 = vector.load %arg3[%c0_6, %c0_7, %c1, %c0_8] : memref<1x18x18x4xbf16, #tpu.memory_space<vmem>>, vector<1x16x16x4xbf16>
    %4 = vector.shape_cast %3 : vector<1x16x16x4xbf16> to vector<16x16x4xbf16>
    %c0_9 = arith.constant 0 : index
    %c0_10 = arith.constant 0 : index
    %c4 = arith.constant 4 : index
    %5 = vector.load %arg7[%c0_9, %c0_10, %c4] : memref<16x16x36xbf16, #tpu.memory_space<vmem>>, vector<16x16x4xbf16>
    tpu.vector_store %arg7[%c0_9, %c0_10, %c4], %4 {strides = array<i32>} : memref<16x16x36xbf16, #tpu.memory_space<vmem>>, vector<16x16x4xbf16>,
    %c0_11 = arith.constant 0 : index
    %c0_12 = arith.constant 0 : index
    %c2 = arith.constant 2 : index
    %c0_13 = arith.constant 0 : index
    %6 = vector.load %arg3[%c0_11, %c0_12, %c2, %c0_13] : memref<1x18x18x4xbf16, #tpu.memory_space<vmem>>, vector<1x16x16x4xbf16>
    %7 = vector.shape_cast %6 : vector<1x16x16x4xbf16> to vector<16x16x4xbf16>
    %c0_14 = arith.constant 0 : index
    %c0_15 = arith.constant 0 : index
    %c8 = arith.constant 8 : index
    %8 = vector.load %arg7[%c0_14, %c0_15, %c8] : memref<16x16x36xbf16, #tpu.memory_space<vmem>>, vector<16x16x4xbf16>
    tpu.vector_store %arg7[%c0_14, %c0_15, %c8], %7 {strides = array<i32>} : memref<16x16x36xbf16, #tpu.memory_space<vmem>>, vector<16x16x4xbf16>,
    %c0_16 = arith.constant 0 : index
    %c1_17 = arith.constant 1 : index
    %c0_18 = arith.constant 0 : index
    %c0_19 = arith.constant 0 : index
    %9 = vector.load %arg3[%c0_16, %c1_17, %c0_18, %c0_19] : memref<1x18x18x4xbf16, #tpu.memory_space<vmem>>, vector<1x16x16x4xbf16>
    %10 = vector.shape_cast %9 : vector<1x16x16x4xbf16> to vector<16x16x4xbf16>
    %c0_20 = arith.constant 0 : index
    %c0_21 = arith.constant 0 : index
    %c12 = arith.constant 12 : index
    %11 = vector.load %arg7[%c0_20, %c0_21, %c12] : memref<16x16x36xbf16, #tpu.memory_space<vmem>>, vector<16x16x4xbf16>
    tpu.vector_store %arg7[%c0_20, %c0_21, %c12], %10 {strides = array<i32>} : memref<16x16x36xbf16, #tpu.memory_space<vmem>>, vector<16x16x4xbf16>,
    %c0_22 = arith.constant 0 : index
    %c1_23 = arith.constant 1 : index
    %c1_24 = arith.constant 1 : index
    %c0_25 = arith.constant 0 : index
    %12 = vector.load %arg3[%c0_22, %c1_23, %c1_24, %c0_25] : memref<1x18x18x4xbf16, #tpu.memory_space<vmem>>, vector<1x16x16x4xbf16>
    %13 = vector.shape_cast %12 : vector<1x16x16x4xbf16> to vector<16x16x4xbf16>
    %c0_26 = arith.constant 0 : index
    %c0_27 = arith.constant 0 : index
    %c16 = arith.constant 16 : index
    %14 = vector.load %arg7[%c0_26, %c0_27, %c16] : memref<16x16x36xbf16, #tpu.memory_space<vmem>>, vector<16x16x4xbf16>
    tpu.vector_store %arg7[%c0_26, %c0_27, %c16], %13 {strides = array<i32>} : memref<16x16x36xbf16, #tpu.memory_space<vmem>>, vector<16x16x4xbf16>,
    %c0_28 = arith.constant 0 : index
    %c1_29 = arith.constant 1 : index
    %c2_30 = arith.constant 2 : index
    %c0_31 = arith.constant 0 : index
    %15 = vector.load %arg3[%c0_28, %c1_29, %c2_30, %c0_31] : memref<1x18x18x4xbf16, #tpu.memory_space<vmem>>, vector<1x16x16x4xbf16>
    %16 = vector.shape_cast %15 : vector<1x16x16x4xbf16> to vector<16x16x4xbf16>
    %c0_32 = arith.constant 0 : index
    %c0_33 = arith.constant 0 : index
    %c20 = arith.constant 20 : index
    %17 = vector.load %arg7[%c0_32, %c0_33, %c20] : memref<16x16x36xbf16, #tpu.memory_space<vmem>>, vector<16x16x4xbf16>
    tpu.vector_store %arg7[%c0_32, %c0_33, %c20], %16 {strides = array<i32>} : memref<16x16x36xbf16, #tpu.memory_space<vmem>>, vector<16x16x4xbf16>,
    %c0_34 = arith.constant 0 : index
    %c2_35 = arith.constant 2 : index
    %c0_36 = arith.constant 0 : index
    %c0_37 = arith.constant 0 : index
    %18 = vector.load %arg3[%c0_34, %c2_35, %c0_36, %c0_37] : memref<1x18x18x4xbf16, #tpu.memory_space<vmem>>, vector<1x16x16x4xbf16>
    %19 = vector.shape_cast %18 : vector<1x16x16x4xbf16> to vector<16x16x4xbf16>
    %c0_38 = arith.constant 0 : index
    %c0_39 = arith.constant 0 : index
    %c24 = arith.constant 24 : index
    %20 = vector.load %arg7[%c0_38, %c0_39, %c24] : memref<16x16x36xbf16, #tpu.memory_space<vmem>>, vector<16x16x4xbf16>
    tpu.vector_store %arg7[%c0_38, %c0_39, %c24], %19 {strides = array<i32>} : memref<16x16x36xbf16, #tpu.memory_space<vmem>>, vector<16x16x4xbf16>,
    %c0_40 = arith.constant 0 : index
    %c2_41 = arith.constant 2 : index
    %c1_42 = arith.constant 1 : index
    %c0_43 = arith.constant 0 : index
    %21 = vector.load %arg3[%c0_40, %c2_41, %c1_42, %c0_43] : memref<1x18x18x4xbf16, #tpu.memory_space<vmem>>, vector<1x16x16x4xbf16>
    %22 = vector.shape_cast %21 : vector<1x16x16x4xbf16> to vector<16x16x4xbf16>
    %c0_44 = arith.constant 0 : index
    %c0_45 = arith.constant 0 : index
    %c28 = arith.constant 28 : index
    %23 = vector.load %arg7[%c0_44, %c0_45, %c28] : memref<16x16x36xbf16, #tpu.memory_space<vmem>>, vector<16x16x4xbf16>
    tpu.vector_store %arg7[%c0_44, %c0_45, %c28], %22 {strides = array<i32>} : memref<16x16x36xbf16, #tpu.memory_space<vmem>>, vector<16x16x4xbf16>,
    %c0_46 = arith.constant 0 : index
    %c2_47 = arith.constant 2 : index
    %c2_48 = arith.constant 2 : index
    %c0_49 = arith.constant 0 : index
    %24 = vector.load %arg3[%c0_46, %c2_47, %c2_48, %c0_49] : memref<1x18x18x4xbf16, #tpu.memory_space<vmem>>, vector<1x16x16x4xbf16>
    %25 = vector.shape_cast %24 : vector<1x16x16x4xbf16> to vector<16x16x4xbf16>
    %c0_50 = arith.constant 0 : index
    %c0_51 = arith.constant 0 : index
    %c32 = arith.constant 32 : index
    %26 = vector.load %arg7[%c0_50, %c0_51, %c32] : memref<16x16x36xbf16, #tpu.memory_space<vmem>>, vector<16x16x4xbf16>
    tpu.vector_store %arg7[%c0_50, %c0_51, %c32], %25 {strides = array<i32>} : memref<16x16x36xbf16, #tpu.memory_space<vmem>>, vector<16x16x4xbf16>,
    %c0_52 = arith.constant 0 : index
    %c0_53 = arith.constant 0 : index
    %c0_54 = arith.constant 0 : index
    %27 = vector.load %arg7[%c0_52, %c0_53, %c0_54] : memref<16x16x36xbf16, #tpu.memory_space<vmem>>, vector<16x16x36xbf16>
    %28 = vector.shape_cast %27 : vector<16x16x36xbf16> to vector<256x36xbf16>
    %c0_55 = arith.constant 0 : index
    %c0_56 = arith.constant 0 : index
    %29 = vector.load %arg4[%c0_55, %c0_56] : memref<36x128xbf16, #tpu.memory_space<vmem>>, vector<36x128xbf16>
    %cst = arith.constant dense<0.000000e+00> : vector<256x128xf32>
    %30 = tpu.matmul %28, %29, %cst {dimension_numbers = #tpu.dot_dimension_numbers<[1], [0], [0], [1], [0, 0, 1, 1], [], []>} : vector<256x36xbf16>, vector<36x128xbf16>, vector<256x128xf32> -> vector<256x128xf32>
    %c0_57 = arith.constant 0 : index
    %c0_58 = arith.constant 0 : index
    %31 = vector.load %arg5[%c0_57, %c0_58] : memref<1x128xf32, #tpu.memory_space<vmem>>, vector<1x128xf32>
    %32 = vector.broadcast %31 : vector<1x128xf32> to vector<256x128xf32>
    %33 = arith.addf %30, %32 : vector<256x128xf32>
    %c0_59 = arith.constant 0 : index
    %c0_60 = arith.constant 0 : index
    %c0_61 = arith.constant 0 : index
    %34 = vector.load %arg6[%c0_59, %c0_60, %c0_61] : memref<1x256x128xf32, #tpu.memory_space<vmem>>, vector<1x256x128xf32>
    %35 = vector.shape_cast %34 : vector<1x256x128xf32> to vector<256x128xf32>
    %36 = vector.shape_cast %33 : vector<256x128xf32> to vector<1x256x128xf32>
    tpu.vector_store %arg6[%c0_59, %c0_60, %c0_61], %36 {strides = array<i32>} : memref<1x256x128xf32, #tpu.memory_space<vmem>>, vector<1x256x128xf32>,
    return
  }
  func.func @transform_0(%arg0: i32, %arg1: i32, %arg2: i32) -> (i32, i32, i32, i32) {
    %c1_i32 = arith.constant 1 : i32
    %0 = arith.muli %arg0, %c1_i32 : i32
    %1 = arith.addi %0, %arg2 : i32
    %c0_i32 = arith.constant 0 : i32
    %c0_i32_0 = arith.constant 0 : i32
    %c0_i32_1 = arith.constant 0 : i32
    %c0_i32_2 = arith.constant 0 : i32
    return %1, %c0_i32, %c0_i32_0, %c0_i32_1 : i32, i32, i32, i32
  }
  func.func @transform_1(%arg0: i32, %arg1: i32, %arg2: i32) -> (i32, i32) {
    %c0_i32 = arith.constant 0 : i32
    %c0_i32_0 = arith.constant 0 : i32
    return %c0_i32, %arg1 : i32, i32
  }
  func.func @transform_2(%arg0: i32, %arg1: i32, %arg2: i32) -> (i32, i32) {
    %c0_i32 = arith.constant 0 : i32
    %c0_i32_0 = arith.constant 0 : i32
    return %c0_i32, %arg1 : i32, i32
  }
  func.func @transform_3(%arg0: i32, %arg1: i32, %arg2: i32) -> (i32, i32, i32) {
    %c1_i32 = arith.constant 1 : i32
    %0 = arith.muli %arg0, %c1_i32 : i32
    %1 = arith.addi %0, %arg2 : i32
    %c0_i32 = arith.constant 0 : i32
    %c0_i32_0 = arith.constant 0 : i32
    return %1, %c0_i32, %arg1 : i32, i32, i32
  }
}

</mosaic_0001>

<llo_original>
// kernel: tpu_custom_call.1
$region0: #{tpu_custom_call.1}
  #allocation0 [shape = 'u32[]', space=smem, size = 0x4, offset = 0x4, fixed_abs, tag = 'smem constant byte address 0x4 - core index']
  #allocation1 [shape = 'u32[144,128]{1,0:T(1,128)}', space=vmem, size = 0x12000, scoped, tag = 'internal scratch']
  #allocation2 [shape = 'bf16[16,16,36]{2,1,0:T(16,128)(2,1)}', space=vmem, size = 0x10000, scoped, tag = 'scratch operand']
  %s0 = inlined_call_operand.vmem [shape: bf16[2,18,18,4], index: 0, kind: input, shape index: {}]
  %s1 = inlined_call_operand.vmem [shape: bf16[36,128], index: 1, kind: input, shape index: {}]
  %s2 = inlined_call_operand.vmem [shape: f32[1,128], index: 2, kind: input, shape index: {}]
  %s3 = inlined_call_operand.hbm [shape: f32[2,256,128], index: 3, kind: output, shape index: {}]
  %s4 = sld [smem:[#allocation0]]
  $region45: #{tpu_custom_call.1} parent=0
    _
  %s6 = ssub.s32 1, %s4
  %s7 = scalar_select 0, %s6, %s4
  $region1: #{tpu_custom_call.1} parent=0
    #allocation3 [shape = 'u8[262144]{0}', space=vmem, size = 0x40000, scoped, tag = 'output window, operand 0']
    #allocation4 [shape = 's32[2]{0}', space=sflag, size = 0x8, scoped, tag = 'scoped memory for tpu_custom_call.1']
    %8 = vsyncpa [#allocation4], 0
    %s9 = scalar_lea.sflag [#allocation4], 1
    %10 = vsyncpa %s9, 0
    loop: start=0, step=1, limit=4
    $region2: #{tpu_custom_call.1} parent=1 // loop_pre_header
      _
    $region3: #{tpu_custom_call.1} parent=1 // loop_header
      %s12 = sphi 0, %s16
      %p13 = scmp.ge.s32.totalorder %s12, 4
      %s19 = sphi 0, %s38
      %s20 = sphi 0, %s34
      %s21 = sphi 0, %s30
      %s22 = sphi 0, %s19
      %s23 = sphi 0, %s20
      %s24 = sphi 0, %s21
      %s25 = sphi 0, %s22
      %s26 = sphi 0, %s23
      %s27 = sphi 0, %s24
      %s43 = sphi 0, %s45
      %s46 = sphi 0, %s43
      %s47 = sphi 0, %s46
      %s63 = sphi 0, %s47
      %s69 = sphi 0, %s71
      %s72 = sphi 0, %s69
      %s73 = sphi 0, %s72
      %s89 = sphi 0, %s73
      %s95 = sphi 0, %s97
      %s98 = sphi 0, %s95
      %s99 = sphi 0, %s98
      %s115 = sphi 0, %s99
      %s125 = sphi 0, %s127
      %s128 = sphi 0, %s125
      %s129 = sphi 0, %s128
      %s145 = sphi 0, %s129
    $region4: #{tpu_custom_call.1} parent=1 // loop_header_branch
      %15 = sbr.rel (%p13) target = $region8
    $region5: #{tpu_custom_call.1} parent=1 // loop_body
      %s17 = ssub.s32 %s12, 1
      %s18 = ssub.s32 %s12, 2
      %s28 = sadd.s32 1, %s21
      %p29 = scmp.ge.s32.totalorder %s28, 1
      %s30 = scalar_select %p29, 0, %s28
      %s31 = sadd.s32 1, %s20
      %s32 = scalar_select %p29, %s31, %s20
      %p33 = scmp.ge.s32.totalorder %s32, 1
      %s34 = scalar_select %p33, 0, %s32
      %s35 = sadd.s32 1, %s19
      %s36 = scalar_select %p33, %s35, %s19
      %p37 = scmp.ge.s32.totalorder %s36, 2
      %s38 = scalar_select %p37, 0, %s36
      %s39 = sadd.s32 %s19, %s21
      %s40 = sadd.s32 %s38, %s30
      %s41 = ssub.s32 %s39, %s40
      %p42 = scmp.eq.s32.totalorder %s41, 0
      %s44 = sadd.s32 %s43, 1
      %s45 = scalar_select %p42, %s43, %s44
      %p48 = pneg %p42
      %p49 = scmp.eq.s32.totalorder %s12, 1
      %p50 = por %p48, %p49
      %p51 = scmp.ne.s32.totalorder %s43, %s46
      %p52 = scmp.eq.s32.totalorder %s12, 0
      %p53 = por %p51, %p52
      %p54 = scmp.ne.s32.totalorder %s43, %s46
      %p55 = scmp.eq.s32.totalorder %s17, 1
      %p56 = por %p54, %p55
      %p57 = scmp.ne.s32.totalorder %s46, %s47
      %p58 = scmp.eq.s32.totalorder %s17, 0
      %p59 = por %p57, %p58
      %p60 = scmp.ne.s32.totalorder %s46, %s47
      %p61 = scmp.eq.s32.totalorder %s18, 1
      %p62 = por %p60, %p61
      %p64 = scmp.ne.s32.totalorder %s47, %s63
      %p65 = scmp.eq.s32.totalorder %s18, 0
      %p66 = por %p64, %p65
      %s67 = ssub.s32 %s20, %s34
      %p68 = scmp.eq.s32.totalorder %s67, 0
      %s70 = sadd.s32 %s69, 1
      %s71 = scalar_select %p68, %s69, %s70
      %p74 = pneg %p68
      %p75 = scmp.eq.s32.totalorder %s12, 1
      %p76 = por %p74, %p75
      %p77 = scmp.ne.s32.totalorder %s69, %s72
      %p78 = scmp.eq.s32.totalorder %s12, 0
      %p79 = por %p77, %p78
      %p80 = scmp.ne.s32.totalorder %s69, %s72
      %p81 = scmp.eq.s32.totalorder %s17, 1
      %p82 = por %p80, %p81
      %p83 = scmp.ne.s32.totalorder %s72, %s73
      %p84 = scmp.eq.s32.totalorder %s17, 0
      %p85 = por %p83, %p84
      %p86 = scmp.ne.s32.totalorder %s72, %s73
      %p87 = scmp.eq.s32.totalorder %s18, 1
      %p88 = por %p86, %p87
      %p90 = scmp.ne.s32.totalorder %s73, %s89
      %p91 = scmp.eq.s32.totalorder %s18, 0
      %p92 = por %p90, %p91
      %s93 = ssub.s32 %s20, %s34
      %p94 = scmp.eq.s32.totalorder %s93, 0
      %s96 = sadd.s32 %s95, 1
      %s97 = scalar_select %p94, %s95, %s96
      %p100 = pneg %p94
      %p101 = scmp.eq.s32.totalorder %s12, 1
      %p102 = por %p100, %p101
      %p103 = scmp.ne.s32.totalorder %s95, %s98
      %p104 = scmp.eq.s32.totalorder %s12, 0
      %p105 = por %p103, %p104
      %p106 = scmp.ne.s32.totalorder %s95, %s98
      %p107 = scmp.eq.s32.totalorder %s17, 1
      %p108 = por %p106, %p107
      %p109 = scmp.ne.s32.totalorder %s98, %s99
      %p110 = scmp.eq.s32.totalorder %s17, 0
      %p111 = por %p109, %p110
      %p112 = scmp.ne.s32.totalorder %s98, %s99
      %p113 = scmp.eq.s32.totalorder %s18, 1
      %p114 = por %p112, %p113
      %p116 = scmp.ne.s32.totalorder %s99, %s115
      %p117 = scmp.eq.s32.totalorder %s18, 0
      %p118 = por %p116, %p117
      %s119 = sadd.s32 %s19, %s21
      %s120 = sadd.s32 %s38, %s30
      %s121 = ssub.s32 %s119, %s120
      %s122 = ssub.s32 %s20, %s34
      %s123 = sor.u32 %s121, %s122
      %p124 = scmp.eq.s32.totalorder %s123, 0
      %s126 = sadd.s32 %s125, 1
      %s127 = scalar_select %p124, %s125, %s126
      %p130 = pneg %p124
      %p131 = scmp.eq.s32.totalorder %s12, 1
      %p132 = por %p130, %p131
      %p133 = scmp.ne.s32.totalorder %s125, %s128
      %p134 = scmp.eq.s32.totalorder %s12, 0
      %p135 = por %p133, %p134
      %p136 = scmp.ne.s32.totalorder %s125, %s128
      %p137 = scmp.eq.s32.totalorder %s17, 1
      %p138 = por %p136, %p137
      %p139 = scmp.ne.s32.totalorder %s128, %s129
      %p140 = scmp.eq.s32.totalorder %s17, 0
      %p141 = por %p139, %p140
      %p142 = scmp.ne.s32.totalorder %s128, %s129
      %p143 = scmp.eq.s32.totalorder %s18, 1
      %p144 = por %p142, %p143
      %p146 = scmp.ne.s32.totalorder %s129, %s145
      %p147 = scmp.eq.s32.totalorder %s18, 0
      %p148 = por %p146, %p147
      %p149 = scmp.le.s32.totalorder 1, %s12
      %p150 = scmp.lt.s32.totalorder %s12, 3
      %p151 = pnand %p149, %p150
      %p152 = pneg %p151
      // Predicated region
      $region9: #{tpu_custom_call.1} parent=5 // pred_check
        _
      $region10: #{tpu_custom_call.1} parent=5 // pred_check_branch
        %154 = sbr.rel (%p151) target = $region12
      $region11: #{tpu_custom_call.1} parent=5 // pred_region
        %s155 = ssub.s32 %s12, 1
        // Predicated region
        $region13: #{tpu_custom_call.1} parent=11 // pred_check
          %p156 = pneg %p85
        $region14: #{tpu_custom_call.1} parent=11 // pred_check_branch
          %158 = sbr.rel (%p156) target = $region16
        $region15: #{tpu_custom_call.1} parent=11 // pred_region
          %p159 = scmp.lt.s32.totalorder %s23, 0
          %s160 = scalar_select %p159, %s23, 0
          %s161 = smul.addr %s160, 4
          %s162 = scalar_lea.vmem %s1, %s161
        $region16: #{tpu_custom_call.1} parent=11 // pred_fallthru
          _
        // Predicated region
        $region17: #{tpu_custom_call.1} parent=11 // pred_check
          %p163 = pneg %p111
        $region18: #{tpu_custom_call.1} parent=11 // pred_check_branch
          %165 = sbr.rel (%p163) target = $region20
        $region19: #{tpu_custom_call.1} parent=11 // pred_region
          %p166 = scmp.lt.s32.totalorder %s23, 0
          %s167 = scalar_select %p166, %s23, 0
          %s168 = scalar_lea.vmem %s2, %s167
        $region20: #{tpu_custom_call.1} parent=11 // pred_fallthru
          _
      $region12: #{tpu_custom_call.1} parent=5 // pred_fallthru
        _
      %p169 = scmp.lt.s32.totalorder %s12, 2
      // Predicated region
      $region21: #{tpu_custom_call.1} parent=5 // pred_check
        %p170 = pneg %p169
      $region22: #{tpu_custom_call.1} parent=5 // pred_check_branch
        %172 = sbr.rel (%p170) target = $region24
      $region23: #{tpu_custom_call.1} parent=5 // pred_region
        // Predicated region
        $region25: #{tpu_custom_call.1} parent=23 // pred_check
          %p173 = pneg %p53
        $region26: #{tpu_custom_call.1} parent=23 // pred_check_branch
          %175 = sbr.rel (%p173) target = $region28
        $region27: #{tpu_custom_call.1} parent=23 // pred_region
          %s176 = sadd.s32 %s19, %s21
          %p177 = scmp.lt.s32.totalorder %s176, 1
          %s178 = scalar_select %p177, %s176, 1
          %s179 = smul.addr %s178, 54
          %s180 = smul.addr %s179, 4
          %s181 = scalar_lea.vmem %s0, %s180
          %s182 = sadd.s32 %s19, %s21
        $region28: #{tpu_custom_call.1} parent=23 // pred_fallthru
          _
      $region24: #{tpu_custom_call.1} parent=5 // pred_fallthru
        _
      %p183 = scmp.le.s32.totalorder 1, %s12
      %p184 = scmp.lt.s32.totalorder %s12, 3
      %p185 = pnand %p183, %p184
      %p186 = pneg %p185
      // Predicated region
      $region29: #{tpu_custom_call.1} parent=5 // pred_check
        _
      $region30: #{tpu_custom_call.1} parent=5 // pred_check_branch
        %188 = sbr.rel (%p185) target = $region32
      $region31: #{tpu_custom_call.1} parent=5 // pred_region
        %s189 = ssub.s32 %s12, 1
        %s190 = sadd.s32 %s22, %s24
        %p191 = scmp.lt.s32.totalorder %s190, 1
        %s192 = scalar_select %p191, %s190, 1
        %s193 = smul.addr %s192, 54
        %s194 = smul.addr %s193, 4
        %s195 = scalar_lea.vmem %s0, %s194
        %p196 = pneg %p59
        %p197 = pneg %p56
        %p198 = scmp.lt.s32.totalorder %s23, 0
        %s199 = scalar_select %p198, %s23, 0
        %s200 = smul.addr %s199, 4
        %s201 = scalar_lea.vmem %s1, %s200
        %p202 = pneg %p85
        %p203 = pneg %p82
        %p204 = scmp.lt.s32.totalorder %s23, 0
        %s205 = scalar_select %p204, %s23, 0
        %s206 = scalar_lea.vmem %s2, %s205
        %p207 = pneg %p111
        %p208 = pneg %p108
        %p209 = pneg %p141
        %p210 = pneg %p138
        %s211 = sand.u32 %s128, 1
        %s212 = scalar_lea.sflag [#allocation4], %s211
        %s213 = sand.u32 %s128, 1
        %s214 = smul.addr %s213, 256
        %s215 = scalar_lea.vmem [#allocation3], %s214
        %s216 = sadd.s32 %s22, %s24
        %p217 = scmp.lt.s32.totalorder %s216, 1
        %s218 = scalar_select %p217, %s216, 1
        %s219 = smul.addr %s218, 54
        %s220 = smul.addr %s219, 4
        %s221 = scalar_lea.vmem %s0, %s220
        %s222 = sadd.s32 %s22, %s24
        %p223 = scmp.lt.s32.totalorder %s23, 0
        %s224 = scalar_select %p223, %s23, 0
        %s225 = smul.addr %s224, 4
        %s226 = scalar_lea.vmem %s1, %s225
        %p227 = scmp.lt.s32.totalorder %s23, 0
        %s228 = scalar_select %p227, %s23, 0
        %s229 = scalar_lea.vmem %s2, %s228
        %s230 = sadd.s32 %s22, %s24
        %v232 = vld [vmem:[%s221] sm:$0xf]
        %v233 = vld [vmem:[%s221 + $0x4] sm:$0xf]
        %v234 = vld [vmem:[%s221 + $0xc] sm:$0xf]
        %v235 = vld [vmem:[%s221 + $0x10] sm:$0xf]
        %v236 = vld [vmem:[%s221 + $0x18] sm:$0xf]
        %v237 = vld [vmem:[%s221 + $0x1c] sm:$0xf]
        %v238 = vld [vmem:[%s221 + $0x24] sm:$0xf]
        %v239 = vld [vmem:[%s221 + $0x28] sm:$0xf]
        %v240 = vld [vmem:[%s221 + $0x30] sm:$0xf]
        %v241 = vld [vmem:[%s221 + $0x34] sm:$0xf]
        %v242 = vld [vmem:[%s221 + $0x3c] sm:$0xf]
        %v243 = vld [vmem:[%s221 + $0x40] sm:$0xf]
        %v244 = vld [vmem:[%s221 + $0x48] sm:$0xf]
        %v245 = vld [vmem:[%s221 + $0x4c] sm:$0xf]
        %v246 = vld [vmem:[%s221 + $0x54] sm:$0xf]
        %v247 = vld [vmem:[%s221 + $0x58] sm:$0xf]
        %v248 = vld [vmem:[%s221 + $0x60] sm:$0xf]
        %v249 = vld [vmem:[%s221 + $0x64] sm:$0xf]
        %v250 = vld [vmem:[%s221 + $0x6c] sm:$0xf]
        %v251 = vld [vmem:[%s221 + $0x70] sm:$0xf]
        %v252 = vld [vmem:[%s221 + $0x78] sm:$0xf]
        %v253 = vld [vmem:[%s221 + $0x7c] sm:$0xf]
        %v254 = vld [vmem:[%s221 + $0x84] sm:$0xf]
        %v255 = vld [vmem:[%s221 + $0x88] sm:$0xf]
        %v256 = vld [vmem:[%s221 + $0x90] sm:$0xf]
        %v257 = vld [vmem:[%s221 + $0x94] sm:$0xf]
        %v258 = vld [vmem:[%s221 + $0x9c] sm:$0xf]
        %v259 = vld [vmem:[%s221 + $0xa0] sm:$0xf]
        %v260 = vld [vmem:[%s221 + $0xa8] sm:$0xf]
        %v261 = vld [vmem:[%s221 + $0xac] sm:$0xf]
        %v262 = vld [vmem:[%s221 + $0xb4] sm:$0xf]
        %v263 = vld [vmem:[%s221 + $0xb8] sm:$0xf]
        %v296 = vunpack.c.l.b16 %v232
        %v297 = vunpack.c.l.b16 %v233
        %v298 = vunpack.c.l.b16 %v234
        %v299 = vunpack.c.l.b16 %v235
        %v300 = vunpack.c.l.b16 %v236
        %v301 = vunpack.c.l.b16 %v237
        %v302 = vunpack.c.l.b16 %v238
        %v303 = vunpack.c.l.b16 %v239
        %v304 = vunpack.c.l.b16 %v240
        %v305 = vunpack.c.l.b16 %v241
        %v306 = vunpack.c.l.b16 %v242
        %v307 = vunpack.c.l.b16 %v243
        %v308 = vunpack.c.l.b16 %v244
        %v309 = vunpack.c.l.b16 %v245
        %v310 = vunpack.c.l.b16 %v246
        %v311 = vunpack.c.l.b16 %v247
        %v312 = vunpack.c.l.b16 %v248
        %v313 = vunpack.c.l.b16 %v249
        %v314 = vunpack.c.l.b16 %v250
        %v315 = vunpack.c.l.b16 %v251
        %v316 = vunpack.c.l.b16 %v252
        %v317 = vunpack.c.l.b16 %v253
        %v318 = vunpack.c.l.b16 %v254
        %v319 = vunpack.c.l.b16 %v255
        %v320 = vunpack.c.l.b16 %v256
        %v321 = vunpack.c.l.b16 %v257
        %v322 = vunpack.c.l.b16 %v258
        %v323 = vunpack.c.l.b16 %v259
        %v324 = vunpack.c.l.b16 %v260
        %v325 = vunpack.c.l.b16 %v261
        %v326 = vunpack.c.l.b16 %v262
        %v327 = vunpack.c.l.b16 %v263
        %v328 = vpack.c.b16 %v297, %v296
        %v329 = vpack.c.b16 %v299, %v298
        %v330 = vpack.c.b16 %v301, %v300
        %v331 = vpack.c.b16 %v303, %v302
        %v332 = vpack.c.b16 %v305, %v304
        %v333 = vpack.c.b16 %v307, %v306
        %v334 = vpack.c.b16 %v309, %v308
        %v335 = vpack.c.b16 %v311, %v310
        %v336 = vpack.c.b16 %v313, %v312
        %v337 = vpack.c.b16 %v315, %v314
        %v338 = vpack.c.b16 %v317, %v316
        %v339 = vpack.c.b16 %v319, %v318
        %v340 = vpack.c.b16 %v321, %v320
        %v341 = vpack.c.b16 %v323, %v322
        %v342 = vpack.c.b16 %v325, %v324
        %v343 = vpack.c.b16 %v327, %v326
        %vm360 = vcmask 31744
        %361 = vst.msk [vmem:[#allocation2] sm:$0xff] %vm360, %v328
        %362 = vst.msk [vmem:[#allocation2 + $0x8] sm:$0xff] %vm360, %v329
        %363 = vst.msk [vmem:[#allocation2 + $0x10] sm:$0xff] %vm360, %v330
        %364 = vst.msk [vmem:[#allocation2 + $0x18] sm:$0xff] %vm360, %v331
        %365 = vst.msk [vmem:[#allocation2 + $0x20] sm:$0xff] %vm360, %v332
        %366 = vst.msk [vmem:[#allocation2 + $0x28] sm:$0xff] %vm360, %v333
        %367 = vst.msk [vmem:[#allocation2 + $0x30] sm:$0xff] %vm360, %v334
        %368 = vst.msk [vmem:[#allocation2 + $0x38] sm:$0xff] %vm360, %v335
        %369 = vst.msk [vmem:[#allocation2 + $0x40] sm:$0xff] %vm360, %v336
        %370 = vst.msk [vmem:[#allocation2 + $0x48] sm:$0xff] %vm360, %v337
        %371 = vst.msk [vmem:[#allocation2 + $0x50] sm:$0xff] %vm360, %v338
        %372 = vst.msk [vmem:[#allocation2 + $0x58] sm:$0xff] %vm360, %v339
        %373 = vst.msk [vmem:[#allocation2 + $0x60] sm:$0xff] %vm360, %v340
        %374 = vst.msk [vmem:[#allocation2 + $0x68] sm:$0xff] %vm360, %v341
        %375 = vst.msk [vmem:[#allocation2 + $0x70] sm:$0xff] %vm360, %v342
        %376 = vst.msk [vmem:[#allocation2 + $0x78] sm:$0xff] %vm360, %v343
        %v377 = vld [vmem:[%s221] sm:$0xf]
        %v378 = vld [vmem:[%s221 + $0x4] sm:$0xf]
        %v379 = vld [vmem:[%s221 + $0x8] sm:$0x1]
        %v380 = vld [vmem:[%s221 + $0xc] sm:$0xf]
        %v381 = vld [vmem:[%s221 + $0x10] sm:$0xf]
        %v382 = vld [vmem:[%s221 + $0x14] sm:$0x1]
        %v383 = vld [vmem:[%s221 + $0x18] sm:$0xf]
        %v384 = vld [vmem:[%s221 + $0x1c] sm:$0xf]
        %v385 = vld [vmem:[%s221 + $0x20] sm:$0x1]
        %v386 = vld [vmem:[%s221 + $0x24] sm:$0xf]
        %v387 = vld [vmem:[%s221 + $0x28] sm:$0xf]
        %v388 = vld [vmem:[%s221 + $0x2c] sm:$0x1]
        %v389 = vld [vmem:[%s221 + $0x30] sm:$0xf]
        %v390 = vld [vmem:[%s221 + $0x34] sm:$0xf]
        %v391 = vld [vmem:[%s221 + $0x38] sm:$0x1]
        %v392 = vld [vmem:[%s221 + $0x3c] sm:$0xf]
        %v393 = vld [vmem:[%s221 + $0x40] sm:$0xf]
        %v394 = vld [vmem:[%s221 + $0x44] sm:$0x1]
        %v395 = vld [vmem:[%s221 + $0x48] sm:$0xf]
        %v396 = vld [vmem:[%s221 + $0x4c] sm:$0xf]
        %v397 = vld [vmem:[%s221 + $0x50] sm:$0x1]
        %v398 = vld [vmem:[%s221 + $0x54] sm:$0xf]
        %v399 = vld [vmem:[%s221 + $0x58] sm:$0xf]
        %v400 = vld [vmem:[%s221 + $0x5c] sm:$0x1]
        %v401 = vld [vmem:[%s221 + $0x60] sm:$0xf]
        %v402 = vld [vmem:[%s221 + $0x64] sm:$0xf]
        %v403 = vld [vmem:[%s221 + $0x68] sm:$0x1]
        %v404 = vld [vmem:[%s221 + $0x6c] sm:$0xf]
        %v405 = vld [vmem:[%s221 + $0x70] sm:$0xf]
        %v406 = vld [vmem:[%s221 + $0x74] sm:$0x1]
        %v407 = vld [vmem:[%s221 + $0x78] sm:$0xf]
        %v408 = vld [vmem:[%s221 + $0x7c] sm:$0xf]
        %v409 = vld [vmem:[%s221 + $0x80] sm:$0x1]
        %v410 = vld [vmem:[%s221 + $0x84] sm:$0xf]
        %v411 = vld [vmem:[%s221 + $0x88] sm:$0xf]
        %v412 = vld [vmem:[%s221 + $0x8c] sm:$0x1]
        %v413 = vld [vmem:[%s221 + $0x90] sm:$0xf]
        %v414 = vld [vmem:[%s221 + $0x94] sm:$0xf]
        %v415 = vld [vmem:[%s221 + $0x98] sm:$0x1]
        %v416 = vld [vmem:[%s221 + $0x9c] sm:$0xf]
        %v417 = vld [vmem:[%s221 + $0xa0] sm:$0xf]
        %v418 = vld [vmem:[%s221 + $0xa4] sm:$0x1]
        %v419 = vld [vmem:[%s221 + $0xa8] sm:$0xf]
        %v420 = vld [vmem:[%s221 + $0xac] sm:$0xf]
        %v421 = vld [vmem:[%s221 + $0xb0] sm:$0x1]
        %v422 = vld [vmem:[%s221 + $0xb4] sm:$0xf]
        %v423 = vld [vmem:[%s221 + $0xb8] sm:$0xf]
        %v424 = vld [vmem:[%s221 + $0xbc] sm:$0x1]
        %v473 = vunpack.c.l.b16 %v377
        %v474 = vunpack.c.l.b16 %v378
        %v475 = vunpack.c.l.b16 %v379
        %v476 = vunpack.c.l.b16 %v380
        %v477 = vunpack.c.l.b16 %v381
        %v478 = vunpack.c.l.b16 %v382
        %v479 = vunpack.c.l.b16 %v383
        %v480 = vunpack.c.l.b16 %v384
        %v481 = vunpack.c.l.b16 %v385
        %v482 = vunpack.c.l.b16 %v386
        %v483 = vunpack.c.l.b16 %v387
        %v484 = vunpack.c.l.b16 %v388
        %v485 = vunpack.c.l.b16 %v389
        %v486 = vunpack.c.l.b16 %v390
        %v487 = vunpack.c.l.b16 %v391
        %v488 = vunpack.c.l.b16 %v392
        %v489 = vunpack.c.l.b16 %v393
        %v490 = vunpack.c.l.b16 %v394
        %v491 = vunpack.c.l.b16 %v395
        %v492 = vunpack.c.l.b16 %v396
        %v493 = vunpack.c.l.b16 %v397
        %v494 = vunpack.c.l.b16 %v398
        %v495 = vunpack.c.l.b16 %v399
        %v496 = vunpack.c.l.b16 %v400
        %v497 = vunpack.c.l.b16 %v401
        %v498 = vunpack.c.l.b16 %v402
        %v499 = vunpack.c.l.b16 %v403
        %v500 = vunpack.c.l.b16 %v404
        %v501 = vunpack.c.l.b16 %v405
        %v502 = vunpack.c.l.b16 %v406
        %v503 = vunpack.c.l.b16 %v407
        %v504 = vunpack.c.l.b16 %v408
        %v505 = vunpack.c.l.b16 %v409
        %v506 = vunpack.c.l.b16 %v410
        %v507 = vunpack.c.l.b16 %v411
        %v508 = vunpack.c.l.b16 %v412
        %v509 = vunpack.c.l.b16 %v413
        %v510 = vunpack.c.l.b16 %v414
        %v511 = vunpack.c.l.b16 %v415
        %v512 = vunpack.c.l.b16 %v416
        %v513 = vunpack.c.l.b16 %v417
        %v514 = vunpack.c.l.b16 %v418
        %v515 = vunpack.c.l.b16 %v419
        %v516 = vunpack.c.l.b16 %v420
        %v517 = vunpack.c.l.b16 %v421
        %v518 = vunpack.c.l.b16 %v422
        %v519 = vunpack.c.l.b16 %v423
        %v520 = vunpack.c.l.b16 %v424
        %v521 = vpack.c.b16 %v474, %v473
        %v522 = vpack.c.b16 %v475, %v475
        %v523 = vpack.c.b16 %v477, %v476
        %v524 = vpack.c.b16 %v478, %v478
        %v525 = vpack.c.b16 %v480, %v479
        %v526 = vpack.c.b16 %v481, %v481
        %v527 = vpack.c.b16 %v483, %v482
        %v528 = vpack.c.b16 %v484, %v484
        %v529 = vpack.c.b16 %v486, %v485
        %v530 = vpack.c.b16 %v487, %v487
        %v531 = vpack.c.b16 %v489, %v488
        %v532 = vpack.c.b16 %v490, %v490
        %v533 = vpack.c.b16 %v492, %v491
        %v534 = vpack.c.b16 %v493, %v493
        %v535 = vpack.c.b16 %v495, %v494
        %v536 = vpack.c.b16 %v496, %v496
        %v537 = vpack.c.b16 %v498, %v497
        %v538 = vpack.c.b16 %v499, %v499
        %v539 = vpack.c.b16 %v501, %v500
        %v540 = vpack.c.b16 %v502, %v502
        %v541 = vpack.c.b16 %v504, %v503
        %v542 = vpack.c.b16 %v505, %v505
        %v543 = vpack.c.b16 %v507, %v506
        %v544 = vpack.c.b16 %v508, %v508
        %v545 = vpack.c.b16 %v510, %v509
        %v546 = vpack.c.b16 %v511, %v511
        %v547 = vpack.c.b16 %v513, %v512
        %v548 = vpack.c.b16 %v514, %v514
        %v549 = vpack.c.b16 %v516, %v515
        %v550 = vpack.c.b16 %v517, %v517
        %v551 = vpack.c.b16 %v519, %v518
        %v552 = vpack.c.b16 %v520, %v520
        %vm553 = vsmask.f32 7424
        %v555 = vshrl.u32 %v521, 16
        %v557 = vshll.u32 %v521, 16
        %v559 = vrot.slane %v557, 1
        %v560 = vor.u32 %v555, %v559
        %v562 = vshll.u32 %v522, 16
        %v564 = vrot.slane %v562, 1
        %v565 = vsel %vm553, %v560, %v564
        %v567 = vshrl.u32 %v523, 16
        %v569 = vshll.u32 %v523, 16
        %v571 = vrot.slane %v569, 1
        %v572 = vor.u32 %v567, %v571
        %v574 = vshll.u32 %v524, 16
        %v576 = vrot.slane %v574, 1
        %v577 = vsel %vm553, %v572, %v576
        %v579 = vshrl.u32 %v525, 16
        %v581 = vshll.u32 %v525, 16
        %v583 = vrot.slane %v581, 1
        %v584 = vor.u32 %v579, %v583
        %v586 = vshll.u32 %v526, 16
        %v588 = vrot.slane %v586, 1
        %v589 = vsel %vm553, %v584, %v588
        %v591 = vshrl.u32 %v527, 16
        %v593 = vshll.u32 %v527, 16
        %v595 = vrot.slane %v593, 1
        %v596 = vor.u32 %v591, %v595
        %v598 = vshll.u32 %v528, 16
        %v600 = vrot.slane %v598, 1
        %v601 = vsel %vm553, %v596, %v600
        %v603 = vshrl.u32 %v529, 16
        %v605 = vshll.u32 %v529, 16
        %v607 = vrot.slane %v605, 1
        %v608 = vor.u32 %v603, %v607
        %v610 = vshll.u32 %v530, 16
        %v612 = vrot.slane %v610, 1
        %v613 = vsel %vm553, %v608, %v612
        %v615 = vshrl.u32 %v531, 16
        %v617 = vshll.u32 %v531, 16
        %v619 = vrot.slane %v617, 1
        %v620 = vor.u32 %v615, %v619
        %v622 = vshll.u32 %v532, 16
        %v624 = vrot.slane %v622, 1
        %v625 = vsel %vm553, %v620, %v624
        %v627 = vshrl.u32 %v533, 16
        %v629 = vshll.u32 %v533, 16
        %v631 = vrot.slane %v629, 1
        %v632 = vor.u32 %v627, %v631
        %v634 = vshll.u32 %v534, 16
        %v636 = vrot.slane %v634, 1
        %v637 = vsel %vm553, %v632, %v636
        %v639 = vshrl.u32 %v535, 16
        %v641 = vshll.u32 %v535, 16
        %v643 = vrot.slane %v641, 1
        %v644 = vor.u32 %v639, %v643
        %v646 = vshll.u32 %v536, 16
        %v648 = vrot.slane %v646, 1
        %v649 = vsel %vm553, %v644, %v648
        %v651 = vshrl.u32 %v537, 16
        %v653 = vshll.u32 %v537, 16
        %v655 = vrot.slane %v653, 1
        %v656 = vor.u32 %v651, %v655
        %v658 = vshll.u32 %v538, 16
        %v660 = vrot.slane %v658, 1
        %v661 = vsel %vm553, %v656, %v660
        %v663 = vshrl.u32 %v539, 16
        %v665 = vshll.u32 %v539, 16
        %v667 = vrot.slane %v665, 1
        %v668 = vor.u32 %v663, %v667
        %v670 = vshll.u32 %v540, 16
        %v672 = vrot.slane %v670, 1
        %v673 = vsel %vm553, %v668, %v672
        %v675 = vshrl.u32 %v541, 16
        %v677 = vshll.u32 %v541, 16
        %v679 = vrot.slane %v677, 1
        %v680 = vor.u32 %v675, %v679
        %v682 = vshll.u32 %v542, 16
        %v684 = vrot.slane %v682, 1
        %v685 = vsel %vm553, %v680, %v684
        %v687 = vshrl.u32 %v543, 16
        %v689 = vshll.u32 %v543, 16
        %v691 = vrot.slane %v689, 1
        %v692 = vor.u32 %v687, %v691
        %v694 = vshll.u32 %v544, 16
        %v696 = vrot.slane %v694, 1
        %v697 = vsel %vm553, %v692, %v696
        %v699 = vshrl.u32 %v545, 16
        %v701 = vshll.u32 %v545, 16
        %v703 = vrot.slane %v701, 1
        %v704 = vor.u32 %v699, %v703
        %v706 = vshll.u32 %v546, 16
        %v708 = vrot.slane %v706, 1
        %v709 = vsel %vm553, %v704, %v708
        %v711 = vshrl.u32 %v547, 16
        %v713 = vshll.u32 %v547, 16
        %v715 = vrot.slane %v713, 1
        %v716 = vor.u32 %v711, %v715
        %v718 = vshll.u32 %v548, 16
        %v720 = vrot.slane %v718, 1
        %v721 = vsel %vm553, %v716, %v720
        %v723 = vshrl.u32 %v549, 16
        %v725 = vshll.u32 %v549, 16
        %v727 = vrot.slane %v725, 1
        %v728 = vor.u32 %v723, %v727
        %v730 = vshll.u32 %v550, 16
        %v732 = vrot.slane %v730, 1
        %v733 = vsel %vm553, %v728, %v732
        %v735 = vshrl.u32 %v551, 16
        %v737 = vshll.u32 %v551, 16
        %v739 = vrot.slane %v737, 1
        %v740 = vor.u32 %v735, %v739
        %v742 = vshll.u32 %v552, 16
        %v744 = vrot.slane %v742, 1
        %v745 = vsel %vm553, %v740, %v744
        %746 = vrot.lane.b32.xlu0 %v565, 4
        %v747 = vpop.permute.xlu0 %746
        %748 = vrot.lane.b32.xlu0 %v577, 4
        %v749 = vpop.permute.xlu0 %748
        %750 = vrot.lane.b32.xlu0 %v589, 4
        %v751 = vpop.permute.xlu0 %750
        %752 = vrot.lane.b32.xlu0 %v601, 4
        %v753 = vpop.permute.xlu0 %752
        %754 = vrot.lane.b32.xlu0 %v613, 4
        %v755 = vpop.permute.xlu0 %754
        %756 = vrot.lane.b32.xlu0 %v625, 4
        %v757 = vpop.permute.xlu0 %756
        %758 = vrot.lane.b32.xlu0 %v637, 4
        %v759 = vpop.permute.xlu0 %758
        %760 = vrot.lane.b32.xlu0 %v649, 4
        %v761 = vpop.permute.xlu0 %760
        %762 = vrot.lane.b32.xlu0 %v661, 4
        %v763 = vpop.permute.xlu0 %762
        %764 = vrot.lane.b32.xlu0 %v673, 4
        %v765 = vpop.permute.xlu0 %764
        %766 = vrot.lane.b32.xlu0 %v685, 4
        %v767 = vpop.permute.xlu0 %766
        %768 = vrot.lane.b32.xlu0 %v697, 4
        %v769 = vpop.permute.xlu0 %768
        %770 = vrot.lane.b32.xlu0 %v709, 4
        %v771 = vpop.permute.xlu0 %770
        %772 = vrot.lane.b32.xlu0 %v721, 4
        %v773 = vpop.permute.xlu0 %772
        %774 = vrot.lane.b32.xlu0 %v733, 4
        %v775 = vpop.permute.xlu0 %774
        %776 = vrot.lane.b32.xlu0 %v745, 4
        %v777 = vpop.permute.xlu0 %776
        %vm794 = vcmask 64544
        %795 = vst.msk [vmem:[#allocation2] sm:$0xff] %vm794, %v747
        %796 = vst.msk [vmem:[#allocation2 + $0x8] sm:$0xff] %vm794, %v749
        %797 = vst.msk [vmem:[#allocation2 + $0x10] sm:$0xff] %vm794, %v751
        %798 = vst.msk [vmem:[#allocation2 + $0x18] sm:$0xff] %vm794, %v753
        %799 = vst.msk [vmem:[#allocation2 + $0x20] sm:$0xff] %vm794, %v755
        %800 = vst.msk [vmem:[#allocation2 + $0x28] sm:$0xff] %vm794, %v757
        %801 = vst.msk [vmem:[#allocation2 + $0x30] sm:$0xff] %vm794, %v759
        %802 = vst.msk [vmem:[#allocation2 + $0x38] sm:$0xff] %vm794, %v761
        %803 = vst.msk [vmem:[#allocation2 + $0x40] sm:$0xff] %vm794, %v763
        %804 = vst.msk [vmem:[#allocation2 + $0x48] sm:$0xff] %vm794, %v765
        %805 = vst.msk [vmem:[#allocation2 + $0x50] sm:$0xff] %vm794, %v767
        %806 = vst.msk [vmem:[#allocation2 + $0x58] sm:$0xff] %vm794, %v769
        %807 = vst.msk [vmem:[#allocation2 + $0x60] sm:$0xff] %vm794, %v771
        %808 = vst.msk [vmem:[#allocation2 + $0x68] sm:$0xff] %vm794, %v773
        %809 = vst.msk [vmem:[#allocation2 + $0x70] sm:$0xff] %vm794, %v775
        %810 = vst.msk [vmem:[#allocation2 + $0x78] sm:$0xff] %vm794, %v777
        %v811 = vld [vmem:[%s221] sm:$0xe]
        %v812 = vld [vmem:[%s221 + $0x4] sm:$0xf]
        %v813 = vld [vmem:[%s221 + $0x8] sm:$0x1]
        %v814 = vld [vmem:[%s221 + $0xc] sm:$0xe]
        %v815 = vld [vmem:[%s221 + $0x10] sm:$0xf]
        %v816 = vld [vmem:[%s221 + $0x14] sm:$0x1]
        %v817 = vld [vmem:[%s221 + $0x18] sm:$0xe]
        %v818 = vld [vmem:[%s221 + $0x1c] sm:$0xf]
        %v819 = vld [vmem:[%s221 + $0x20] sm:$0x1]
        %v820 = vld [vmem:[%s221 + $0x24] sm:$0xe]
        %v821 = vld [vmem:[%s221 + $0x28] sm:$0xf]
        %v822 = vld [vmem:[%s221 + $0x2c] sm:$0x1]
        %v823 = vld [vmem:[%s221 + $0x30] sm:$0xe]
        %v824 = vld [vmem:[%s221 + $0x34] sm:$0xf]
        %v825 = vld [vmem:[%s221 + $0x38] sm:$0x1]
        %v826 = vld [vmem:[%s221 + $0x3c] sm:$0xe]
        %v827 = vld [vmem:[%s221 + $0x40] sm:$0xf]
        %v828 = vld [vmem:[%s221 + $0x44] sm:$0x1]
        %v829 = vld [vmem:[%s221 + $0x48] sm:$0xe]
        %v830 = vld [vmem:[%s221 + $0x4c] sm:$0xf]
        %v831 = vld [vmem:[%s221 + $0x50] sm:$0x1]
        %v832 = vld [vmem:[%s221 + $0x54] sm:$0xe]
        %v833 = vld [vmem:[%s221 + $0x58] sm:$0xf]
        %v834 = vld [vmem:[%s221 + $0x5c] sm:$0x1]
        %v835 = vld [vmem:[%s221 + $0x60] sm:$0xe]
        %v836 = vld [vmem:[%s221 + $0x64] sm:$0xf]
        %v837 = vld [vmem:[%s221 + $0x68] sm:$0x1]
        %v838 = vld [vmem:[%s221 + $0x6c] sm:$0xe]
        %v839 = vld [vmem:[%s221 + $0x70] sm:$0xf]
        %v840 = vld [vmem:[%s221 + $0x74] sm:$0x1]
        %v841 = vld [vmem:[%s221 + $0x78] sm:$0xe]
        %v842 = vld [vmem:[%s221 + $0x7c] sm:$0xf]
        %v843 = vld [vmem:[%s221 + $0x80] sm:$0x1]
        %v844 = vld [vmem:[%s221 + $0x84] sm:$0xe]
        %v845 = vld [vmem:[%s221 + $0x88] sm:$0xf]
        %v846 = vld [vmem:[%s221 + $0x8c] sm:$0x1]
        %v847 = vld [vmem:[%s221 + $0x90] sm:$0xe]
        %v848 = vld [vmem:[%s221 + $0x94] sm:$0xf]
        %v849 = vld [vmem:[%s221 + $0x98] sm:$0x1]
        %v850 = vld [vmem:[%s221 + $0x9c] sm:$0xe]
        %v851 = vld [vmem:[%s221 + $0xa0] sm:$0xf]
        %v852 = vld [vmem:[%s221 + $0xa4] sm:$0x1]
        %v853 = vld [vmem:[%s221 + $0xa8] sm:$0xe]
        %v854 = vld [vmem:[%s221 + $0xac] sm:$0xf]
        %v855 = vld [vmem:[%s221 + $0xb0] sm:$0x1]
        %v856 = vld [vmem:[%s221 + $0xb4] sm:$0xe]
        %v857 = vld [vmem:[%s221 + $0xb8] sm:$0xf]
        %v858 = vld [vmem:[%s221 + $0xbc] sm:$0x1]
        %v907 = vunpack.c.l.b16 %v811
        %v908 = vunpack.c.l.b16 %v812
        %v909 = vunpack.c.l.b16 %v813
        %v910 = vunpack.c.l.b16 %v814
        %v911 = vunpack.c.l.b16 %v815
        %v912 = vunpack.c.l.b16 %v816
        %v913 = vunpack.c.l.b16 %v817
        %v914 = vunpack.c.l.b16 %v818
        %v915 = vunpack.c.l.b16 %v819
        %v916 = vunpack.c.l.b16 %v820
        %v917 = vunpack.c.l.b16 %v821
        %v918 = vunpack.c.l.b16 %v822
        %v919 = vunpack.c.l.b16 %v823
        %v920 = vunpack.c.l.b16 %v824
        %v921 = vunpack.c.l.b16 %v825
        %v922 = vunpack.c.l.b16 %v826
        %v923 = vunpack.c.l.b16 %v827
        %v924 = vunpack.c.l.b16 %v828
        %v925 = vunpack.c.l.b16 %v829
        %v926 = vunpack.c.l.b16 %v830
        %v927 = vunpack.c.l.b16 %v831
        %v928 = vunpack.c.l.b16 %v832
        %v929 = vunpack.c.l.b16 %v833
        %v930 = vunpack.c.l.b16 %v834
        %v931 = vunpack.c.l.b16 %v835
        %v932 = vunpack.c.l.b16 %v836
        %v933 = vunpack.c.l.b16 %v837
        %v934 = vunpack.c.l.b16 %v838
        %v935 = vunpack.c.l.b16 %v839
        %v936 = vunpack.c.l.b16 %v840
        %v937 = vunpack.c.l.b16 %v841
        %v938 = vunpack.c.l.b16 %v842
        %v939 = vunpack.c.l.b16 %v843
        %v940 = vunpack.c.l.b16 %v844
        %v941 = vunpack.c.l.b16 %v845
        %v942 = vunpack.c.l.b16 %v846
        %v943 = vunpack.c.l.b16 %v847
        %v944 = vunpack.c.l.b16 %v848
        %v945 = vunpack.c.l.b16 %v849
        %v946 = vunpack.c.l.b16 %v850
        %v947 = vunpack.c.l.b16 %v851
        %v948 = vunpack.c.l.b16 %v852
        %v949 = vunpack.c.l.b16 %v853
        %v950 = vunpack.c.l.b16 %v854
        %v951 = vunpack.c.l.b16 %v855
        %v952 = vunpack.c.l.b16 %v856
        %v953 = vunpack.c.l.b16 %v857
        %v954 = vunpack.c.l.b16 %v858
        %v955 = vpack.c.b16 %v908, %v907
        %v956 = vpack.c.b16 %v909, %v909
        %v957 = vpack.c.b16 %v911, %v910
        %v958 = vpack.c.b16 %v912, %v912
        %v959 = vpack.c.b16 %v914, %v913
        %v960 = vpack.c.b16 %v915, %v915
        %v961 = vpack.c.b16 %v917, %v916
        %v962 = vpack.c.b16 %v918, %v918
        %v963 = vpack.c.b16 %v920, %v919
        %v964 = vpack.c.b16 %v921, %v921
        %v965 = vpack.c.b16 %v923, %v922
        %v966 = vpack.c.b16 %v924, %v924
        %v967 = vpack.c.b16 %v926, %v925
        %v968 = vpack.c.b16 %v927, %v927
        %v969 = vpack.c.b16 %v929, %v928
        %v970 = vpack.c.b16 %v930, %v930
        %v971 = vpack.c.b16 %v932, %v931
        %v972 = vpack.c.b16 %v933, %v933
        %v973 = vpack.c.b16 %v935, %v934
        %v974 = vpack.c.b16 %v936, %v936
        %v975 = vpack.c.b16 %v938, %v937
        %v976 = vpack.c.b16 %v939, %v939
        %v977 = vpack.c.b16 %v941, %v940
        %v978 = vpack.c.b16 %v942, %v942
        %v979 = vpack.c.b16 %v944, %v943
        %v980 = vpack.c.b16 %v945, %v945
        %v981 = vpack.c.b16 %v947, %v946
        %v982 = vpack.c.b16 %v948, %v948
        %v983 = vpack.c.b16 %v950, %v949
        %v984 = vpack.c.b16 %v951, %v951
        %v985 = vpack.c.b16 %v953, %v952
        %v986 = vpack.c.b16 %v954, %v954
        %vm987 = vcmask 1046528
        %v988 = vrot.slane %v955, 1
        %v989 = vrot.slane %v956, 1
        %v990 = vsel %vm987, %v988, %v989
        %v991 = vrot.slane %v957, 1
        %v992 = vrot.slane %v958, 1
        %v993 = vsel %vm987, %v991, %v992
        %v994 = vrot.slane %v959, 1
        %v995 = vrot.slane %v960, 1
        %v996 = vsel %vm987, %v994, %v995
        %v997 = vrot.slane %v961, 1
        %v998 = vrot.slane %v962, 1
        %v999 = vsel %vm987, %v997, %v998
        %v1000 = vrot.slane %v963, 1
        %v1001 = vrot.slane %v964, 1
        %v1002 = vsel %vm987, %v1000, %v1001
        %v1003 = vrot.slane %v965, 1
        %v1004 = vrot.slane %v966, 1
        %v1005 = vsel %vm987, %v1003, %v1004
        %v1006 = vrot.slane %v967, 1
        %v1007 = vrot.slane %v968, 1
        %v1008 = vsel %vm987, %v1006, %v1007
        %v1009 = vrot.slane %v969, 1
        %v1010 = vrot.slane %v970, 1
        %v1011 = vsel %vm987, %v1009, %v1010
        %v1012 = vrot.slane %v971, 1
        %v1013 = vrot.slane %v972, 1
        %v1014 = vsel %vm987, %v1012, %v1013
        %v1015 = vrot.slane %v973, 1
        %v1016 = vrot.slane %v974, 1
        %v1017 = vsel %vm987, %v1015, %v1016
        %v1018 = vrot.slane %v975, 1
        %v1019 = vrot.slane %v976, 1
        %v1020 = vsel %vm987, %v1018, %v1019
        %v1021 = vrot.slane %v977, 1
        %v1022 = vrot.slane %v978, 1
        %v1023 = vsel %vm987, %v1021, %v1022
        %v1024 = vrot.slane %v979, 1
        %v1025 = vrot.slane %v980, 1
        %v1026 = vsel %vm987, %v1024, %v1025
        %v1027 = vrot.slane %v981, 1
        %v1028 = vrot.slane %v982, 1
        %v1029 = vsel %vm987, %v1027, %v1028
        %v1030 = vrot.slane %v983, 1
        %v1031 = vrot.slane %v984, 1
        %v1032 = vsel %vm987, %v1030, %v1031
        %v1033 = vrot.slane %v985, 1
        %v1034 = vrot.slane %v986, 1
        %v1035 = vsel %vm987, %v1033, %v1034
        %1036 = vrot.lane.b32.xlu0 %v990, 8
        %v1037 = vpop.permute.xlu0 %1036
        %1038 = vrot.lane.b32.xlu0 %v993, 8
        %v1039 = vpop.permute.xlu0 %1038
        %1040 = vrot.lane.b32.xlu0 %v996, 8
        %v1041 = vpop.permute.xlu0 %1040
        %1042 = vrot.lane.b32.xlu0 %v999, 8
        %v1043 = vpop.permute.xlu0 %1042
        %1044 = vrot.lane.b32.xlu0 %v1002, 8
        %v1045 = vpop.permute.xlu0 %1044
        %1046 = vrot.lane.b32.xlu0 %v1005, 8
        %v1047 = vpop.permute.xlu0 %1046
        %1048 = vrot.lane.b32.xlu0 %v1008, 8
        %v1049 = vpop.permute.xlu0 %1048
        %1050 = vrot.lane.b32.xlu0 %v1011, 8
        %v1051 = vpop.permute.xlu0 %1050
        %1052 = vrot.lane.b32.xlu0 %v1014, 8
        %v1053 = vpop.permute.xlu0 %1052
        %1054 = vrot.lane.b32.xlu0 %v1017, 8
        %v1055 = vpop.permute.xlu0 %1054
        %1056 = vrot.lane.b32.xlu0 %v1020, 8
        %v1057 = vpop.permute.xlu0 %1056
        %1058 = vrot.lane.b32.xlu0 %v1023, 8
        %v1059 = vpop.permute.xlu0 %1058
        %1060 = vrot.lane.b32.xlu0 %v1026, 8
        %v1061 = vpop.permute.xlu0 %1060
        %1062 = vrot.lane.b32.xlu0 %v1029, 8
        %v1063 = vpop.permute.xlu0 %1062
        %1064 = vrot.lane.b32.xlu0 %v1032, 8
        %v1065 = vpop.permute.xlu0 %1064
        %1066 = vrot.lane.b32.xlu0 %v1035, 8
        %v1067 = vpop.permute.xlu0 %1066
        %vm1084 = vcmask 97344
        %1085 = vst.msk [vmem:[#allocation2] sm:$0xff] %vm1084, %v1037
        %1086 = vst.msk [vmem:[#allocation2 + $0x8] sm:$0xff] %vm1084, %v1039
        %1087 = vst.msk [vmem:[#allocation2 + $0x10] sm:$0xff] %vm1084, %v1041
        %1088 = vst.msk [vmem:[#allocation2 + $0x18] sm:$0xff] %vm1084, %v1043
        %1089 = vst.msk [vmem:[#allocation2 + $0x20] sm:$0xff] %vm1084, %v1045
        %1090 = vst.msk [vmem:[#allocation2 + $0x28] sm:$0xff] %vm1084, %v1047
        %1091 = vst.msk [vmem:[#allocation2 + $0x30] sm:$0xff] %vm1084, %v1049
        %1092 = vst.msk [vmem:[#allocation2 + $0x38] sm:$0xff] %vm1084, %v1051
        %1093 = vst.msk [vmem:[#allocation2 + $0x40] sm:$0xff] %vm1084, %v1053
        %1094 = vst.msk [vmem:[#allocation2 + $0x48] sm:$0xff] %vm1084, %v1055
        %1095 = vst.msk [vmem:[#allocation2 + $0x50] sm:$0xff] %vm1084, %v1057
        %1096 = vst.msk [vmem:[#allocation2 + $0x58] sm:$0xff] %vm1084, %v1059
        %1097 = vst.msk [vmem:[#allocation2 + $0x60] sm:$0xff] %vm1084, %v1061
        %1098 = vst.msk [vmem:[#allocation2 + $0x68] sm:$0xff] %vm1084, %v1063
        %1099 = vst.msk [vmem:[#allocation2 + $0x70] sm:$0xff] %vm1084, %v1065
        %1100 = vst.msk [vmem:[#allocation2 + $0x78] sm:$0xff] %vm1084, %v1067
        %s1101 = scalar_lea.vmem %s221, 12
        %v1102 = vld [vmem:[%s1101] sm:$0xf]
        %v1103 = vld [vmem:[%s1101 + $0x4] sm:$0xf]
        %v1104 = vld [vmem:[%s1101 + $0xc] sm:$0xf]
        %v1105 = vld [vmem:[%s1101 + $0x10] sm:$0xf]
        %v1106 = vld [vmem:[%s1101 + $0x18] sm:$0xf]
        %v1107 = vld [vmem:[%s1101 + $0x1c] sm:$0xf]
        %v1108 = vld [vmem:[%s1101 + $0x24] sm:$0xf]
        %v1109 = vld [vmem:[%s1101 + $0x28] sm:$0xf]
        %v1110 = vld [vmem:[%s1101 + $0x30] sm:$0xf]
        %v1111 = vld [vmem:[%s1101 + $0x34] sm:$0xf]
        %v1112 = vld [vmem:[%s1101 + $0x3c] sm:$0xf]
        %v1113 = vld [vmem:[%s1101 + $0x40] sm:$0xf]
        %v1114 = vld [vmem:[%s1101 + $0x48] sm:$0xf]
        %v1115 = vld [vmem:[%s1101 + $0x4c] sm:$0xf]
        %v1116 = vld [vmem:[%s1101 + $0x54] sm:$0xf]
        %v1117 = vld [vmem:[%s1101 + $0x58] sm:$0xf]
        %v1118 = vld [vmem:[%s1101 + $0x60] sm:$0xf]
        %v1119 = vld [vmem:[%s1101 + $0x64] sm:$0xf]
        %v1120 = vld [vmem:[%s1101 + $0x6c] sm:$0xf]
        %v1121 = vld [vmem:[%s1101 + $0x70] sm:$0xf]
        %v1122 = vld [vmem:[%s1101 + $0x78] sm:$0xf]
        %v1123 = vld [vmem:[%s1101 + $0x7c] sm:$0xf]
        %v1124 = vld [vmem:[%s1101 + $0x84] sm:$0xf]
        %v1125 = vld [vmem:[%s1101 + $0x88] sm:$0xf]
        %v1126 = vld [vmem:[%s1101 + $0x90] sm:$0xf]
        %v1127 = vld [vmem:[%s1101 + $0x94] sm:$0xf]
        %v1128 = vld [vmem:[%s1101 + $0x9c] sm:$0xf]
        %v1129 = vld [vmem:[%s1101 + $0xa0] sm:$0xf]
        %v1130 = vld [vmem:[%s1101 + $0xa8] sm:$0xf]
        %v1131 = vld [vmem:[%s1101 + $0xac] sm:$0xf]
        %v1132 = vld [vmem:[%s1101 + $0xb4] sm:$0xf]
        %v1133 = vld [vmem:[%s1101 + $0xb8] sm:$0xf]
        %v1166 = vunpack.c.l.b16 %v1102
        %v1167 = vunpack.c.l.b16 %v1103
        %v1168 = vunpack.c.l.b16 %v1104
        %v1169 = vunpack.c.l.b16 %v1105
        %v1170 = vunpack.c.l.b16 %v1106
        %v1171 = vunpack.c.l.b16 %v1107
        %v1172 = vunpack.c.l.b16 %v1108
        %v1173 = vunpack.c.l.b16 %v1109
        %v1174 = vunpack.c.l.b16 %v1110
        %v1175 = vunpack.c.l.b16 %v1111
        %v1176 = vunpack.c.l.b16 %v1112
        %v1177 = vunpack.c.l.b16 %v1113
        %v1178 = vunpack.c.l.b16 %v1114
        %v1179 = vunpack.c.l.b16 %v1115
        %v1180 = vunpack.c.l.b16 %v1116
        %v1181 = vunpack.c.l.b16 %v1117
        %v1182 = vunpack.c.l.b16 %v1118
        %v1183 = vunpack.c.l.b16 %v1119
        %v1184 = vunpack.c.l.b16 %v1120
        %v1185 = vunpack.c.l.b16 %v1121
        %v1186 = vunpack.c.l.b16 %v1122
        %v1187 = vunpack.c.l.b16 %v1123
        %v1188 = vunpack.c.l.b16 %v1124
        %v1189 = vunpack.c.l.b16 %v1125
        %v1190 = vunpack.c.l.b16 %v1126
        %v1191 = vunpack.c.l.b16 %v1127
        %v1192 = vunpack.c.l.b16 %v1128
        %v1193 = vunpack.c.l.b16 %v1129
        %v1194 = vunpack.c.l.b16 %v1130
        %v1195 = vunpack.c.l.b16 %v1131
        %v1196 = vunpack.c.l.b16 %v1132
        %v1197 = vunpack.c.l.b16 %v1133
        %v1198 = vpack.c.b16 %v1167, %v1166
        %v1199 = vpack.c.b16 %v1169, %v1168
        %v1200 = vpack.c.b16 %v1171, %v1170
        %v1201 = vpack.c.b16 %v1173, %v1172
        %v1202 = vpack.c.b16 %v1175, %v1174
        %v1203 = vpack.c.b16 %v1177, %v1176
        %v1204 = vpack.c.b16 %v1179, %v1178
        %v1205 = vpack.c.b16 %v1181, %v1180
        %v1206 = vpack.c.b16 %v1183, %v1182
        %v1207 = vpack.c.b16 %v1185, %v1184
        %v1208 = vpack.c.b16 %v1187, %v1186
        %v1209 = vpack.c.b16 %v1189, %v1188
        %v1210 = vpack.c.b16 %v1191, %v1190
        %v1211 = vpack.c.b16 %v1193, %v1192
        %v1212 = vpack.c.b16 %v1195, %v1194
        %v1213 = vpack.c.b16 %v1197, %v1196
        %1214 = vrot.lane.b32.xlu0 %v1198, 12
        %v1215 = vpop.permute.xlu0 %1214
        %1216 = vrot.lane.b32.xlu0 %v1199, 12
        %v1217 = vpop.permute.xlu0 %1216
        %1218 = vrot.lane.b32.xlu0 %v1200, 12
        %v1219 = vpop.permute.xlu0 %1218
        %1220 = vrot.lane.b32.xlu0 %v1201, 12
        %v1221 = vpop.permute.xlu0 %1220
        %1222 = vrot.lane.b32.xlu0 %v1202, 12
        %v1223 = vpop.permute.xlu0 %1222
        %1224 = vrot.lane.b32.xlu0 %v1203, 12
        %v1225 = vpop.permute.xlu0 %1224
        %1226 = vrot.lane.b32.xlu0 %v1204, 12
        %v1227 = vpop.permute.xlu0 %1226
        %1228 = vrot.lane.b32.xlu0 %v1205, 12
        %v1229 = vpop.permute.xlu0 %1228
        %1230 = vrot.lane.b32.xlu0 %v1206, 12
        %v1231 = vpop.permute.xlu0 %1230
        %1232 = vrot.lane.b32.xlu0 %v1207, 12
        %v1233 = vpop.permute.xlu0 %1232
        %1234 = vrot.lane.b32.xlu0 %v1208, 12
        %v1235 = vpop.permute.xlu0 %1234
        %1236 = vrot.lane.b32.xlu0 %v1209, 12
        %v1237 = vpop.permute.xlu0 %1236
        %1238 = vrot.lane.b32.xlu0 %v1210, 12
        %v1239 = vpop.permute.xlu0 %1238
        %1240 = vrot.lane.b32.xlu0 %v1211, 12
        %v1241 = vpop.permute.xlu0 %1240
        %1242 = vrot.lane.b32.xlu0 %v1212, 12
        %v1243 = vpop.permute.xlu0 %1242
        %1244 = vrot.lane.b32.xlu0 %v1213, 12
        %v1245 = vpop.permute.xlu0 %1244
        %vm1262 = vcmask 130144
        %1263 = vst.msk [vmem:[#allocation2] sm:$0xff] %vm1262, %v1215
        %1264 = vst.msk [vmem:[#allocation2 + $0x8] sm:$0xff] %vm1262, %v1217
        %1265 = vst.msk [vmem:[#allocation2 + $0x10] sm:$0xff] %vm1262, %v1219
        %1266 = vst.msk [vmem:[#allocation2 + $0x18] sm:$0xff] %vm1262, %v1221
        %1267 = vst.msk [vmem:[#allocation2 + $0x20] sm:$0xff] %vm1262, %v1223
        %1268 = vst.msk [vmem:[#allocation2 + $0x28] sm:$0xff] %vm1262, %v1225
        %1269 = vst.msk [vmem:[#allocation2 + $0x30] sm:$0xff] %vm1262, %v1227
        %1270 = vst.msk [vmem:[#allocation2 + $0x38] sm:$0xff] %vm1262, %v1229
        %1271 = vst.msk [vmem:[#allocation2 + $0x40] sm:$0xff] %vm1262, %v1231
        %1272 = vst.msk [vmem:[#allocation2 + $0x48] sm:$0xff] %vm1262, %v1233
        %1273 = vst.msk [vmem:[#allocation2 + $0x50] sm:$0xff] %vm1262, %v1235
        %1274 = vst.msk [vmem:[#allocation2 + $0x58] sm:$0xff] %vm1262, %v1237
        %1275 = vst.msk [vmem:[#allocation2 + $0x60] sm:$0xff] %vm1262, %v1239
        %1276 = vst.msk [vmem:[#allocation2 + $0x68] sm:$0xff] %vm1262, %v1241
        %1277 = vst.msk [vmem:[#allocation2 + $0x70] sm:$0xff] %vm1262, %v1243
        %1278 = vst.msk [vmem:[#allocation2 + $0x78] sm:$0xff] %vm1262, %v1245
        %v1279 = vld [vmem:[%s1101] sm:$0xf]
        %v1280 = vld [vmem:[%s1101 + $0x4] sm:$0xf]
        %v1281 = vld [vmem:[%s1101 + $0x8] sm:$0x1]
        %v1282 = vld [vmem:[%s1101 + $0xc] sm:$0xf]
        %v1283 = vld [vmem:[%s1101 + $0x10] sm:$0xf]
        %v1284 = vld [vmem:[%s1101 + $0x14] sm:$0x1]
        %v1285 = vld [vmem:[%s1101 + $0x18] sm:$0xf]
        %v1286 = vld [vmem:[%s1101 + $0x1c] sm:$0xf]
        %v1287 = vld [vmem:[%s1101 + $0x20] sm:$0x1]
        %v1288 = vld [vmem:[%s1101 + $0x24] sm:$0xf]
        %v1289 = vld [vmem:[%s1101 + $0x28] sm:$0xf]
        %v1290 = vld [vmem:[%s1101 + $0x2c] sm:$0x1]
        %v1291 = vld [vmem:[%s1101 + $0x30] sm:$0xf]
        %v1292 = vld [vmem:[%s1101 + $0x34] sm:$0xf]
        %v1293 = vld [vmem:[%s1101 + $0x38] sm:$0x1]
        %v1294 = vld [vmem:[%s1101 + $0x3c] sm:$0xf]
        %v1295 = vld [vmem:[%s1101 + $0x40] sm:$0xf]
        %v1296 = vld [vmem:[%s1101 + $0x44] sm:$0x1]
        %v1297 = vld [vmem:[%s1101 + $0x48] sm:$0xf]
        %v1298 = vld [vmem:[%s1101 + $0x4c] sm:$0xf]
        %v1299 = vld [vmem:[%s1101 + $0x50] sm:$0x1]
        %v1300 = vld [vmem:[%s1101 + $0x54] sm:$0xf]
        %v1301 = vld [vmem:[%s1101 + $0x58] sm:$0xf]
        %v1302 = vld [vmem:[%s1101 + $0x5c] sm:$0x1]
        %v1303 = vld [vmem:[%s1101 + $0x60] sm:$0xf]
        %v1304 = vld [vmem:[%s1101 + $0x64] sm:$0xf]
        %v1305 = vld [vmem:[%s1101 + $0x68] sm:$0x1]
        %v1306 = vld [vmem:[%s1101 + $0x6c] sm:$0xf]
        %v1307 = vld [vmem:[%s1101 + $0x70] sm:$0xf]
        %v1308 = vld [vmem:[%s1101 + $0x74] sm:$0x1]
        %v1309 = vld [vmem:[%s1101 + $0x78] sm:$0xf]
        %v1310 = vld [vmem:[%s1101 + $0x7c] sm:$0xf]
        %v1311 = vld [vmem:[%s1101 + $0x80] sm:$0x1]
        %v1312 = vld [vmem:[%s1101 + $0x84] sm:$0xf]
        %v1313 = vld [vmem:[%s1101 + $0x88] sm:$0xf]
        %v1314 = vld [vmem:[%s1101 + $0x8c] sm:$0x1]
        %v1315 = vld [vmem:[%s1101 + $0x90] sm:$0xf]
        %v1316 = vld [vmem:[%s1101 + $0x94] sm:$0xf]
        %v1317 = vld [vmem:[%s1101 + $0x98] sm:$0x1]
        %v1318 = vld [vmem:[%s1101 + $0x9c] sm:$0xf]
        %v1319 = vld [vmem:[%s1101 + $0xa0] sm:$0xf]
        %v1320 = vld [vmem:[%s1101 + $0xa4] sm:$0x1]
        %v1321 = vld [vmem:[%s1101 + $0xa8] sm:$0xf]
        %v1322 = vld [vmem:[%s1101 + $0xac] sm:$0xf]
        %v1323 = vld [vmem:[%s1101 + $0xb0] sm:$0x1]
        %v1324 = vld [vmem:[%s1101 + $0xb4] sm:$0xf]
        %v1325 = vld [vmem:[%s1101 + $0xb8] sm:$0xf]
        %v1326 = vld [vmem:[%s1101 + $0xbc] sm:$0x1]
        %v1375 = vunpack.c.l.b16 %v1279
        %v1376 = vunpack.c.l.b16 %v1280
        %v1377 = vunpack.c.l.b16 %v1281
        %v1378 = vunpack.c.l.b16 %v1282
        %v1379 = vunpack.c.l.b16 %v1283
        %v1380 = vunpack.c.l.b16 %v1284
        %v1381 = vunpack.c.l.b16 %v1285
        %v1382 = vunpack.c.l.b16 %v1286
        %v1383 = vunpack.c.l.b16 %v1287
        %v1384 = vunpack.c.l.b16 %v1288
        %v1385 = vunpack.c.l.b16 %v1289
        %v1386 = vunpack.c.l.b16 %v1290
        %v1387 = vunpack.c.l.b16 %v1291
        %v1388 = vunpack.c.l.b16 %v1292
        %v1389 = vunpack.c.l.b16 %v1293
        %v1390 = vunpack.c.l.b16 %v1294
        %v1391 = vunpack.c.l.b16 %v1295
        %v1392 = vunpack.c.l.b16 %v1296
        %v1393 = vunpack.c.l.b16 %v1297
        %v1394 = vunpack.c.l.b16 %v1298
        %v1395 = vunpack.c.l.b16 %v1299
        %v1396 = vunpack.c.l.b16 %v1300
        %v1397 = vunpack.c.l.b16 %v1301
        %v1398 = vunpack.c.l.b16 %v1302
        %v1399 = vunpack.c.l.b16 %v1303
        %v1400 = vunpack.c.l.b16 %v1304
        %v1401 = vunpack.c.l.b16 %v1305
        %v1402 = vunpack.c.l.b16 %v1306
        %v1403 = vunpack.c.l.b16 %v1307
        %v1404 = vunpack.c.l.b16 %v1308
        %v1405 = vunpack.c.l.b16 %v1309
        %v1406 = vunpack.c.l.b16 %v1310
        %v1407 = vunpack.c.l.b16 %v1311
        %v1408 = vunpack.c.l.b16 %v1312
        %v1409 = vunpack.c.l.b16 %v1313
        %v1410 = vunpack.c.l.b16 %v1314
        %v1411 = vunpack.c.l.b16 %v1315
        %v1412 = vunpack.c.l.b16 %v1316
        %v1413 = vunpack.c.l.b16 %v1317
        %v1414 = vunpack.c.l.b16 %v1318
        %v1415 = vunpack.c.l.b16 %v1319
        %v1416 = vunpack.c.l.b16 %v1320
        %v1417 = vunpack.c.l.b16 %v1321
        %v1418 = vunpack.c.l.b16 %v1322
        %v1419 = vunpack.c.l.b16 %v1323
        %v1420 = vunpack.c.l.b16 %v1324
        %v1421 = vunpack.c.l.b16 %v1325
        %v1422 = vunpack.c.l.b16 %v1326
        %v1423 = vpack.c.b16 %v1376, %v1375
        %v1424 = vpack.c.b16 %v1377, %v1377
        %v1425 = vpack.c.b16 %v1379, %v1378
        %v1426 = vpack.c.b16 %v1380, %v1380
        %v1427 = vpack.c.b16 %v1382, %v1381
        %v1428 = vpack.c.b16 %v1383, %v1383
        %v1429 = vpack.c.b16 %v1385, %v1384
        %v1430 = vpack.c.b16 %v1386, %v1386
        %v1431 = vpack.c.b16 %v1388, %v1387
        %v1432 = vpack.c.b16 %v1389, %v1389
        %v1433 = vpack.c.b16 %v1391, %v1390
        %v1434 = vpack.c.b16 %v1392, %v1392
        %v1435 = vpack.c.b16 %v1394, %v1393
        %v1436 = vpack.c.b16 %v1395, %v1395
        %v1437 = vpack.c.b16 %v1397, %v1396
        %v1438 = vpack.c.b16 %v1398, %v1398
        %v1439 = vpack.c.b16 %v1400, %v1399
        %v1440 = vpack.c.b16 %v1401, %v1401
        %v1441 = vpack.c.b16 %v1403, %v1402
        %v1442 = vpack.c.b16 %v1404, %v1404
        %v1443 = vpack.c.b16 %v1406, %v1405
        %v1444 = vpack.c.b16 %v1407, %v1407
        %v1445 = vpack.c.b16 %v1409, %v1408
        %v1446 = vpack.c.b16 %v1410, %v1410
        %v1447 = vpack.c.b16 %v1412, %v1411
        %v1448 = vpack.c.b16 %v1413, %v1413
        %v1449 = vpack.c.b16 %v1415, %v1414
        %v1450 = vpack.c.b16 %v1416, %v1416
        %v1451 = vpack.c.b16 %v1418, %v1417
        %v1452 = vpack.c.b16 %v1419, %v1419
        %v1453 = vpack.c.b16 %v1421, %v1420
        %v1454 = vpack.c.b16 %v1422, %v1422
        %v1456 = vshrl.u32 %v1423, 16
        %v1458 = vshll.u32 %v1423, 16
        %v1460 = vrot.slane %v1458, 1
        %v1461 = vor.u32 %v1456, %v1460
        %v1463 = vshll.u32 %v1424, 16
        %v1465 = vrot.slane %v1463, 1
        %v1466 = vsel %vm553, %v1461, %v1465
        %v1468 = vshrl.u32 %v1425, 16
        %v1470 = vshll.u32 %v1425, 16
        %v1472 = vrot.slane %v1470, 1
        %v1473 = vor.u32 %v1468, %v1472
        %v1475 = vshll.u32 %v1426, 16
        %v1477 = vrot.slane %v1475, 1
        %v1478 = vsel %vm553, %v1473, %v1477
        %v1480 = vshrl.u32 %v1427, 16
        %v1482 = vshll.u32 %v1427, 16
        %v1484 = vrot.slane %v1482, 1
        %v1485 = vor.u32 %v1480, %v1484
        %v1487 = vshll.u32 %v1428, 16
        %v1489 = vrot.slane %v1487, 1
        %v1490 = vsel %vm553, %v1485, %v1489
        %v1492 = vshrl.u32 %v1429, 16
        %v1494 = vshll.u32 %v1429, 16
        %v1496 = vrot.slane %v1494, 1
        %v1497 = vor.u32 %v1492, %v1496
        %v1499 = vshll.u32 %v1430, 16
        %v1501 = vrot.slane %v1499, 1
        %v1502 = vsel %vm553, %v1497, %v1501
        %v1504 = vshrl.u32 %v1431, 16
        %v1506 = vshll.u32 %v1431, 16
        %v1508 = vrot.slane %v1506, 1
        %v1509 = vor.u32 %v1504, %v1508
        %v1511 = vshll.u32 %v1432, 16
        %v1513 = vrot.slane %v1511, 1
        %v1514 = vsel %vm553, %v1509, %v1513
        %v1516 = vshrl.u32 %v1433, 16
        %v1518 = vshll.u32 %v1433, 16
        %v1520 = vrot.slane %v1518, 1
        %v1521 = vor.u32 %v1516, %v1520
        %v1523 = vshll.u32 %v1434, 16
        %v1525 = vrot.slane %v1523, 1
        %v1526 = vsel %vm553, %v1521, %v1525
        %v1528 = vshrl.u32 %v1435, 16
        %v1530 = vshll.u32 %v1435, 16
        %v1532 = vrot.slane %v1530, 1
        %v1533 = vor.u32 %v1528, %v1532
        %v1535 = vshll.u32 %v1436, 16
        %v1537 = vrot.slane %v1535, 1
        %v1538 = vsel %vm553, %v1533, %v1537
        %v1540 = vshrl.u32 %v1437, 16
        %v1542 = vshll.u32 %v1437, 16
        %v1544 = vrot.slane %v1542, 1
        %v1545 = vor.u32 %v1540, %v1544
        %v1547 = vshll.u32 %v1438, 16
        %v1549 = vrot.slane %v1547, 1
        %v1550 = vsel %vm553, %v1545, %v1549
        %v1552 = vshrl.u32 %v1439, 16
        %v1554 = vshll.u32 %v1439, 16
        %v1556 = vrot.slane %v1554, 1
        %v1557 = vor.u32 %v1552, %v1556
        %v1559 = vshll.u32 %v1440, 16
        %v1561 = vrot.slane %v1559, 1
        %v1562 = vsel %vm553, %v1557, %v1561
        %v1564 = vshrl.u32 %v1441, 16
        %v1566 = vshll.u32 %v1441, 16
        %v1568 = vrot.slane %v1566, 1
        %v1569 = vor.u32 %v1564, %v1568
        %v1571 = vshll.u32 %v1442, 16
        %v1573 = vrot.slane %v1571, 1
        %v1574 = vsel %vm553, %v1569, %v1573
        %v1576 = vshrl.u32 %v1443, 16
        %v1578 = vshll.u32 %v1443, 16
        %v1580 = vrot.slane %v1578, 1
        %v1581 = vor.u32 %v1576, %v1580
        %v1583 = vshll.u32 %v1444, 16
        %v1585 = vrot.slane %v1583, 1
        %v1586 = vsel %vm553, %v1581, %v1585
        %v1588 = vshrl.u32 %v1445, 16
        %v1590 = vshll.u32 %v1445, 16
        %v1592 = vrot.slane %v1590, 1
        %v1593 = vor.u32 %v1588, %v1592
        %v1595 = vshll.u32 %v1446, 16
        %v1597 = vrot.slane %v1595, 1
        %v1598 = vsel %vm553, %v1593, %v1597
        %v1600 = vshrl.u32 %v1447, 16
        %v1602 = vshll.u32 %v1447, 16
        %v1604 = vrot.slane %v1602, 1
        %v1605 = vor.u32 %v1600, %v1604
        %v1607 = vshll.u32 %v1448, 16
        %v1609 = vrot.slane %v1607, 1
        %v1610 = vsel %vm553, %v1605, %v1609
        %v1612 = vshrl.u32 %v1449, 16
        %v1614 = vshll.u32 %v1449, 16
        %v1616 = vrot.slane %v1614, 1
        %v1617 = vor.u32 %v1612, %v1616
        %v1619 = vshll.u32 %v1450, 16
        %v1621 = vrot.slane %v1619, 1
        %v1622 = vsel %vm553, %v1617, %v1621
        %v1624 = vshrl.u32 %v1451, 16
        %v1626 = vshll.u32 %v1451, 16
        %v1628 = vrot.slane %v1626, 1
        %v1629 = vor.u32 %v1624, %v1628
        %v1631 = vshll.u32 %v1452, 16
        %v1633 = vrot.slane %v1631, 1
        %v1634 = vsel %vm553, %v1629, %v1633
        %v1636 = vshrl.u32 %v1453, 16
        %v1638 = vshll.u32 %v1453, 16
        %v1640 = vrot.slane %v1638, 1
        %v1641 = vor.u32 %v1636, %v1640
        %v1643 = vshll.u32 %v1454, 16
        %v1645 = vrot.slane %v1643, 1
        %v1646 = vsel %vm553, %v1641, %v1645
        %1647 = vrot.lane.b32.xlu0 %v1466, 16
        %v1648 = vpop.permute.xlu0 %1647
        %1649 = vrot.lane.b32.xlu0 %v1478, 16
        %v1650 = vpop.permute.xlu0 %1649
        %1651 = vrot.lane.b32.xlu0 %v1490, 16
        %v1652 = vpop.permute.xlu0 %1651
        %1653 = vrot.lane.b32.xlu0 %v1502, 16
        %v1654 = vpop.permute.xlu0 %1653
        %1655 = vrot.lane.b32.xlu0 %v1514, 16
        %v1656 = vpop.permute.xlu0 %1655
        %1657 = vrot.lane.b32.xlu0 %v1526, 16
        %v1658 = vpop.permute.xlu0 %1657
        %1659 = vrot.lane.b32.xlu0 %v1538, 16
        %v1660 = vpop.permute.xlu0 %1659
        %1661 = vrot.lane.b32.xlu0 %v1550, 16
        %v1662 = vpop.permute.xlu0 %1661
        %1663 = vrot.lane.b32.xlu0 %v1562, 16
        %v1664 = vpop.permute.xlu0 %1663
        %1665 = vrot.lane.b32.xlu0 %v1574, 16
        %v1666 = vpop.permute.xlu0 %1665
        %1667 = vrot.lane.b32.xlu0 %v1586, 16
        %v1668 = vpop.permute.xlu0 %1667
        %1669 = vrot.lane.b32.xlu0 %v1598, 16
        %v1670 = vpop.permute.xlu0 %1669
        %1671 = vrot.lane.b32.xlu0 %v1610, 16
        %v1672 = vpop.permute.xlu0 %1671
        %1673 = vrot.lane.b32.xlu0 %v1622, 16
        %v1674 = vpop.permute.xlu0 %1673
        %1675 = vrot.lane.b32.xlu0 %v1634, 16
        %v1676 = vpop.permute.xlu0 %1675
        %1677 = vrot.lane.b32.xlu0 %v1646, 16
        %v1678 = vpop.permute.xlu0 %1677
        %vm1695 = vcmask 162944
        %1696 = vst.msk [vmem:[#allocation2] sm:$0xff] %vm1695, %v1648
        %1697 = vst.msk [vmem:[#allocation2 + $0x8] sm:$0xff] %vm1695, %v1650
        %1698 = vst.msk [vmem:[#allocation2 + $0x10] sm:$0xff] %vm1695, %v1652
        %1699 = vst.msk [vmem:[#allocation2 + $0x18] sm:$0xff] %vm1695, %v1654
        %1700 = vst.msk [vmem:[#allocation2 + $0x20] sm:$0xff] %vm1695, %v1656
        %1701 = vst.msk [vmem:[#allocation2 + $0x28] sm:$0xff] %vm1695, %v1658
        %1702 = vst.msk [vmem:[#allocation2 + $0x30] sm:$0xff] %vm1695, %v1660
        %1703 = vst.msk [vmem:[#allocation2 + $0x38] sm:$0xff] %vm1695, %v1662
        %1704 = vst.msk [vmem:[#allocation2 + $0x40] sm:$0xff] %vm1695, %v1664
        %1705 = vst.msk [vmem:[#allocation2 + $0x48] sm:$0xff] %vm1695, %v1666
        %1706 = vst.msk [vmem:[#allocation2 + $0x50] sm:$0xff] %vm1695, %v1668
        %1707 = vst.msk [vmem:[#allocation2 + $0x58] sm:$0xff] %vm1695, %v1670
        %1708 = vst.msk [vmem:[#allocation2 + $0x60] sm:$0xff] %vm1695, %v1672
        %1709 = vst.msk [vmem:[#allocation2 + $0x68] sm:$0xff] %vm1695, %v1674
        %1710 = vst.msk [vmem:[#allocation2 + $0x70] sm:$0xff] %vm1695, %v1676
        %1711 = vst.msk [vmem:[#allocation2 + $0x78] sm:$0xff] %vm1695, %v1678
        %v1712 = vld [vmem:[%s1101] sm:$0xe]
        %v1713 = vld [vmem:[%s1101 + $0x4] sm:$0xf]
        %v1714 = vld [vmem:[%s1101 + $0x8] sm:$0x1]
        %v1715 = vld [vmem:[%s1101 + $0xc] sm:$0xe]
        %v1716 = vld [vmem:[%s1101 + $0x10] sm:$0xf]
        %v1717 = vld [vmem:[%s1101 + $0x14] sm:$0x1]
        %v1718 = vld [vmem:[%s1101 + $0x18] sm:$0xe]
        %v1719 = vld [vmem:[%s1101 + $0x1c] sm:$0xf]
        %v1720 = vld [vmem:[%s1101 + $0x20] sm:$0x1]
        %v1721 = vld [vmem:[%s1101 + $0x24] sm:$0xe]
        %v1722 = vld [vmem:[%s1101 + $0x28] sm:$0xf]
        %v1723 = vld [vmem:[%s1101 + $0x2c] sm:$0x1]
        %v1724 = vld [vmem:[%s1101 + $0x30] sm:$0xe]
        %v1725 = vld [vmem:[%s1101 + $0x34] sm:$0xf]
        %v1726 = vld [vmem:[%s1101 + $0x38] sm:$0x1]
        %v1727 = vld [vmem:[%s1101 + $0x3c] sm:$0xe]
        %v1728 = vld [vmem:[%s1101 + $0x40] sm:$0xf]
        %v1729 = vld [vmem:[%s1101 + $0x44] sm:$0x1]
        %v1730 = vld [vmem:[%s1101 + $0x48] sm:$0xe]
        %v1731 = vld [vmem:[%s1101 + $0x4c] sm:$0xf]
        %v1732 = vld [vmem:[%s1101 + $0x50] sm:$0x1]
        %v1733 = vld [vmem:[%s1101 + $0x54] sm:$0xe]
        %v1734 = vld [vmem:[%s1101 + $0x58] sm:$0xf]
        %v1735 = vld [vmem:[%s1101 + $0x5c] sm:$0x1]
        %v1736 = vld [vmem:[%s1101 + $0x60] sm:$0xe]
        %v1737 = vld [vmem:[%s1101 + $0x64] sm:$0xf]
        %v1738 = vld [vmem:[%s1101 + $0x68] sm:$0x1]
        %v1739 = vld [vmem:[%s1101 + $0x6c] sm:$0xe]
        %v1740 = vld [vmem:[%s1101 + $0x70] sm:$0xf]
        %v1741 = vld [vmem:[%s1101 + $0x74] sm:$0x1]
        %v1742 = vld [vmem:[%s1101 + $0x78] sm:$0xe]
        %v1743 = vld [vmem:[%s1101 + $0x7c] sm:$0xf]
        %v1744 = vld [vmem:[%s1101 + $0x80] sm:$0x1]
        %v1745 = vld [vmem:[%s1101 + $0x84] sm:$0xe]
        %v1746 = vld [vmem:[%s1101 + $0x88] sm:$0xf]
        %v1747 = vld [vmem:[%s1101 + $0x8c] sm:$0x1]
        %v1748 = vld [vmem:[%s1101 + $0x90] sm:$0xe]
        %v1749 = vld [vmem:[%s1101 + $0x94] sm:$0xf]
        %v1750 = vld [vmem:[%s1101 + $0x98] sm:$0x1]
        %v1751 = vld [vmem:[%s1101 + $0x9c] sm:$0xe]
        %v1752 = vld [vmem:[%s1101 + $0xa0] sm:$0xf]
        %v1753 = vld [vmem:[%s1101 + $0xa4] sm:$0x1]
        %v1754 = vld [vmem:[%s1101 + $0xa8] sm:$0xe]
        %v1755 = vld [vmem:[%s1101 + $0xac] sm:$0xf]
        %v1756 = vld [vmem:[%s1101 + $0xb0] sm:$0x1]
        %v1757 = vld [vmem:[%s1101 + $0xb4] sm:$0xe]
        %v1758 = vld [vmem:[%s1101 + $0xb8] sm:$0xf]
        %v1759 = vld [vmem:[%s1101 + $0xbc] sm:$0x1]
        %v1808 = vunpack.c.l.b16 %v1712
        %v1809 = vunpack.c.l.b16 %v1713
        %v1810 = vunpack.c.l.b16 %v1714
        %v1811 = vunpack.c.l.b16 %v1715
        %v1812 = vunpack.c.l.b16 %v1716
        %v1813 = vunpack.c.l.b16 %v1717
        %v1814 = vunpack.c.l.b16 %v1718
        %v1815 = vunpack.c.l.b16 %v1719
        %v1816 = vunpack.c.l.b16 %v1720
        %v1817 = vunpack.c.l.b16 %v1721
        %v1818 = vunpack.c.l.b16 %v1722
        %v1819 = vunpack.c.l.b16 %v1723
        %v1820 = vunpack.c.l.b16 %v1724
        %v1821 = vunpack.c.l.b16 %v1725
        %v1822 = vunpack.c.l.b16 %v1726
        %v1823 = vunpack.c.l.b16 %v1727
        %v1824 = vunpack.c.l.b16 %v1728
        %v1825 = vunpack.c.l.b16 %v1729
        %v1826 = vunpack.c.l.b16 %v1730
        %v1827 = vunpack.c.l.b16 %v1731
        %v1828 = vunpack.c.l.b16 %v1732
        %v1829 = vunpack.c.l.b16 %v1733
        %v1830 = vunpack.c.l.b16 %v1734
        %v1831 = vunpack.c.l.b16 %v1735
        %v1832 = vunpack.c.l.b16 %v1736
        %v1833 = vunpack.c.l.b16 %v1737
        %v1834 = vunpack.c.l.b16 %v1738
        %v1835 = vunpack.c.l.b16 %v1739
        %v1836 = vunpack.c.l.b16 %v1740
        %v1837 = vunpack.c.l.b16 %v1741
        %v1838 = vunpack.c.l.b16 %v1742
        %v1839 = vunpack.c.l.b16 %v1743
        %v1840 = vunpack.c.l.b16 %v1744
        %v1841 = vunpack.c.l.b16 %v1745
        %v1842 = vunpack.c.l.b16 %v1746
        %v1843 = vunpack.c.l.b16 %v1747
        %v1844 = vunpack.c.l.b16 %v1748
        %v1845 = vunpack.c.l.b16 %v1749
        %v1846 = vunpack.c.l.b16 %v1750
        %v1847 = vunpack.c.l.b16 %v1751
        %v1848 = vunpack.c.l.b16 %v1752
        %v1849 = vunpack.c.l.b16 %v1753
        %v1850 = vunpack.c.l.b16 %v1754
        %v1851 = vunpack.c.l.b16 %v1755
        %v1852 = vunpack.c.l.b16 %v1756
        %v1853 = vunpack.c.l.b16 %v1757
        %v1854 = vunpack.c.l.b16 %v1758
        %v1855 = vunpack.c.l.b16 %v1759
        %v1856 = vpack.c.b16 %v1809, %v1808
        %v1857 = vpack.c.b16 %v1810, %v1810
        %v1858 = vpack.c.b16 %v1812, %v1811
        %v1859 = vpack.c.b16 %v1813, %v1813
        %v1860 = vpack.c.b16 %v1815, %v1814
        %v1861 = vpack.c.b16 %v1816, %v1816
        %v1862 = vpack.c.b16 %v1818, %v1817
        %v1863 = vpack.c.b16 %v1819, %v1819
        %v1864 = vpack.c.b16 %v1821, %v1820
        %v1865 = vpack.c.b16 %v1822, %v1822
        %v1866 = vpack.c.b16 %v1824, %v1823
        %v1867 = vpack.c.b16 %v1825, %v1825
        %v1868 = vpack.c.b16 %v1827, %v1826
        %v1869 = vpack.c.b16 %v1828, %v1828
        %v1870 = vpack.c.b16 %v1830, %v1829
        %v1871 = vpack.c.b16 %v1831, %v1831
        %v1872 = vpack.c.b16 %v1833, %v1832
        %v1873 = vpack.c.b16 %v1834, %v1834
        %v1874 = vpack.c.b16 %v1836, %v1835
        %v1875 = vpack.c.b16 %v1837, %v1837
        %v1876 = vpack.c.b16 %v1839, %v1838
        %v1877 = vpack.c.b16 %v1840, %v1840
        %v1878 = vpack.c.b16 %v1842, %v1841
        %v1879 = vpack.c.b16 %v1843, %v1843
        %v1880 = vpack.c.b16 %v1845, %v1844
        %v1881 = vpack.c.b16 %v1846, %v1846
        %v1882 = vpack.c.b16 %v1848, %v1847
        %v1883 = vpack.c.b16 %v1849, %v1849
        %v1884 = vpack.c.b16 %v1851, %v1850
        %v1885 = vpack.c.b16 %v1852, %v1852
        %v1886 = vpack.c.b16 %v1854, %v1853
        %v1887 = vpack.c.b16 %v1855, %v1855
        %v1888 = vrot.slane %v1856, 1
        %v1889 = vrot.slane %v1857, 1
        %v1890 = vsel %vm987, %v1888, %v1889
        %v1891 = vrot.slane %v1858, 1
        %v1892 = vrot.slane %v1859, 1
        %v1893 = vsel %vm987, %v1891, %v1892
        %v1894 = vrot.slane %v1860, 1
        %v1895 = vrot.slane %v1861, 1
        %v1896 = vsel %vm987, %v1894, %v1895
        %v1897 = vrot.slane %v1862, 1
        %v1898 = vrot.slane %v1863, 1
        %v1899 = vsel %vm987, %v1897, %v1898
        %v1900 = vrot.slane %v1864, 1
        %v1901 = vrot.slane %v1865, 1
        %v1902 = vsel %vm987, %v1900, %v1901
        %v1903 = vrot.slane %v1866, 1
        %v1904 = vrot.slane %v1867, 1
        %v1905 = vsel %vm987, %v1903, %v1904
        %v1906 = vrot.slane %v1868, 1
        %v1907 = vrot.slane %v1869, 1
        %v1908 = vsel %vm987, %v1906, %v1907
        %v1909 = vrot.slane %v1870, 1
        %v1910 = vrot.slane %v1871, 1
        %v1911 = vsel %vm987, %v1909, %v1910
        %v1912 = vrot.slane %v1872, 1
        %v1913 = vrot.slane %v1873, 1
        %v1914 = vsel %vm987, %v1912, %v1913
        %v1915 = vrot.slane %v1874, 1
        %v1916 = vrot.slane %v1875, 1
        %v1917 = vsel %vm987, %v1915, %v1916
        %v1918 = vrot.slane %v1876, 1
        %v1919 = vrot.slane %v1877, 1
        %v1920 = vsel %vm987, %v1918, %v1919
        %v1921 = vrot.slane %v1878, 1
        %v1922 = vrot.slane %v1879, 1
        %v1923 = vsel %vm987, %v1921, %v1922
        %v1924 = vrot.slane %v1880, 1
        %v1925 = vrot.slane %v1881, 1
        %v1926 = vsel %vm987, %v1924, %v1925
        %v1927 = vrot.slane %v1882, 1
        %v1928 = vrot.slane %v1883, 1
        %v1929 = vsel %vm987, %v1927, %v1928
        %v1930 = vrot.slane %v1884, 1
        %v1931 = vrot.slane %v1885, 1
        %v1932 = vsel %vm987, %v1930, %v1931
        %v1933 = vrot.slane %v1886, 1
        %v1934 = vrot.slane %v1887, 1
        %v1935 = vsel %vm987, %v1933, %v1934
        %1936 = vrot.lane.b32.xlu0 %v1890, 20
        %v1937 = vpop.permute.xlu0 %1936
        %1938 = vrot.lane.b32.xlu0 %v1893, 20
        %v1939 = vpop.permute.xlu0 %1938
        %1940 = vrot.lane.b32.xlu0 %v1896, 20
        %v1941 = vpop.permute.xlu0 %1940
        %1942 = vrot.lane.b32.xlu0 %v1899, 20
        %v1943 = vpop.permute.xlu0 %1942
        %1944 = vrot.lane.b32.xlu0 %v1902, 20
        %v1945 = vpop.permute.xlu0 %1944
        %1946 = vrot.lane.b32.xlu0 %v1905, 20
        %v1947 = vpop.permute.xlu0 %1946
        %1948 = vrot.lane.b32.xlu0 %v1908, 20
        %v1949 = vpop.permute.xlu0 %1948
        %1950 = vrot.lane.b32.xlu0 %v1911, 20
        %v1951 = vpop.permute.xlu0 %1950
        %1952 = vrot.lane.b32.xlu0 %v1914, 20
        %v1953 = vpop.permute.xlu0 %1952
        %1954 = vrot.lane.b32.xlu0 %v1917, 20
        %v1955 = vpop.permute.xlu0 %1954
        %1956 = vrot.lane.b32.xlu0 %v1920, 20
        %v1957 = vpop.permute.xlu0 %1956
        %1958 = vrot.lane.b32.xlu0 %v1923, 20
        %v1959 = vpop.permute.xlu0 %1958
        %1960 = vrot.lane.b32.xlu0 %v1926, 20
        %v1961 = vpop.permute.xlu0 %1960
        %1962 = vrot.lane.b32.xlu0 %v1929, 20
        %v1963 = vpop.permute.xlu0 %1962
        %1964 = vrot.lane.b32.xlu0 %v1932, 20
        %v1965 = vpop.permute.xlu0 %1964
        %1966 = vrot.lane.b32.xlu0 %v1935, 20
        %v1967 = vpop.permute.xlu0 %1966
        %vm1984 = vcmask 195744
        %1985 = vst.msk [vmem:[#allocation2] sm:$0xff] %vm1984, %v1937
        %1986 = vst.msk [vmem:[#allocation2 + $0x8] sm:$0xff] %vm1984, %v1939
        %1987 = vst.msk [vmem:[#allocation2 + $0x10] sm:$0xff] %vm1984, %v1941
        %1988 = vst.msk [vmem:[#allocation2 + $0x18] sm:$0xff] %vm1984, %v1943
        %1989 = vst.msk [vmem:[#allocation2 + $0x20] sm:$0xff] %vm1984, %v1945
        %1990 = vst.msk [vmem:[#allocation2 + $0x28] sm:$0xff] %vm1984, %v1947
        %1991 = vst.msk [vmem:[#allocation2 + $0x30] sm:$0xff] %vm1984, %v1949
        %1992 = vst.msk [vmem:[#allocation2 + $0x38] sm:$0xff] %vm1984, %v1951
        %1993 = vst.msk [vmem:[#allocation2 + $0x40] sm:$0xff] %vm1984, %v1953
        %1994 = vst.msk [vmem:[#allocation2 + $0x48] sm:$0xff] %vm1984, %v1955
        %1995 = vst.msk [vmem:[#allocation2 + $0x50] sm:$0xff] %vm1984, %v1957
        %1996 = vst.msk [vmem:[#allocation2 + $0x58] sm:$0xff] %vm1984, %v1959
        %1997 = vst.msk [vmem:[#allocation2 + $0x60] sm:$0xff] %vm1984, %v1961
        %1998 = vst.msk [vmem:[#allocation2 + $0x68] sm:$0xff] %vm1984, %v1963
        %1999 = vst.msk [vmem:[#allocation2 + $0x70] sm:$0xff] %vm1984, %v1965
        %2000 = vst.msk [vmem:[#allocation2 + $0x78] sm:$0xff] %vm1984, %v1967
        %s2001 = scalar_lea.vmem %s221, 24
        %v2002 = vld [vmem:[%s2001] sm:$0xf]
        %v2003 = vld [vmem:[%s2001 + $0x4] sm:$0xf]
        %v2004 = vld [vmem:[%s2001 + $0xc] sm:$0xf]
        %v2005 = vld [vmem:[%s2001 + $0x10] sm:$0xf]
        %v2006 = vld [vmem:[%s2001 + $0x18] sm:$0xf]
        %v2007 = vld [vmem:[%s2001 + $0x1c] sm:$0xf]
        %v2008 = vld [vmem:[%s2001 + $0x24] sm:$0xf]
        %v2009 = vld [vmem:[%s2001 + $0x28] sm:$0xf]
        %v2010 = vld [vmem:[%s2001 + $0x30] sm:$0xf]
        %v2011 = vld [vmem:[%s2001 + $0x34] sm:$0xf]
        %v2012 = vld [vmem:[%s2001 + $0x3c] sm:$0xf]
        %v2013 = vld [vmem:[%s2001 + $0x40] sm:$0xf]
        %v2014 = vld [vmem:[%s2001 + $0x48] sm:$0xf]
        %v2015 = vld [vmem:[%s2001 + $0x4c] sm:$0xf]
        %v2016 = vld [vmem:[%s2001 + $0x54] sm:$0xf]
        %v2017 = vld [vmem:[%s2001 + $0x58] sm:$0xf]
        %v2018 = vld [vmem:[%s2001 + $0x60] sm:$0xf]
        %v2019 = vld [vmem:[%s2001 + $0x64] sm:$0xf]
        %v2020 = vld [vmem:[%s2001 + $0x6c] sm:$0xf]
        %v2021 = vld [vmem:[%s2001 + $0x70] sm:$0xf]
        %v2022 = vld [vmem:[%s2001 + $0x78] sm:$0xf]
        %v2023 = vld [vmem:[%s2001 + $0x7c] sm:$0xf]
        %v2024 = vld [vmem:[%s2001 + $0x84] sm:$0xf]
        %v2025 = vld [vmem:[%s2001 + $0x88] sm:$0xf]
        %v2026 = vld [vmem:[%s2001 + $0x90] sm:$0xf]
        %v2027 = vld [vmem:[%s2001 + $0x94] sm:$0xf]
        %v2028 = vld [vmem:[%s2001 + $0x9c] sm:$0xf]
        %v2029 = vld [vmem:[%s2001 + $0xa0] sm:$0xf]
        %v2030 = vld [vmem:[%s2001 + $0xa8] sm:$0xf]
        %v2031 = vld [vmem:[%s2001 + $0xac] sm:$0xf]
        %v2032 = vld [vmem:[%s2001 + $0xb4] sm:$0xf]
        %v2033 = vld [vmem:[%s2001 + $0xb8] sm:$0xf]
        %v2066 = vunpack.c.l.b16 %v2002
        %v2067 = vunpack.c.l.b16 %v2003
        %v2068 = vunpack.c.l.b16 %v2004
        %v2069 = vunpack.c.l.b16 %v2005
        %v2070 = vunpack.c.l.b16 %v2006
        %v2071 = vunpack.c.l.b16 %v2007
        %v2072 = vunpack.c.l.b16 %v2008
        %v2073 = vunpack.c.l.b16 %v2009
        %v2074 = vunpack.c.l.b16 %v2010
        %v2075 = vunpack.c.l.b16 %v2011
        %v2076 = vunpack.c.l.b16 %v2012
        %v2077 = vunpack.c.l.b16 %v2013
        %v2078 = vunpack.c.l.b16 %v2014
        %v2079 = vunpack.c.l.b16 %v2015
        %v2080 = vunpack.c.l.b16 %v2016
        %v2081 = vunpack.c.l.b16 %v2017
        %v2082 = vunpack.c.l.b16 %v2018
        %v2083 = vunpack.c.l.b16 %v2019
        %v2084 = vunpack.c.l.b16 %v2020
        %v2085 = vunpack.c.l.b16 %v2021
        %v2086 = vunpack.c.l.b16 %v2022
        %v2087 = vunpack.c.l.b16 %v2023
        %v2088 = vunpack.c.l.b16 %v2024
        %v2089 = vunpack.c.l.b16 %v2025
        %v2090 = vunpack.c.l.b16 %v2026
        %v2091 = vunpack.c.l.b16 %v2027
        %v2092 = vunpack.c.l.b16 %v2028
        %v2093 = vunpack.c.l.b16 %v2029
        %v2094 = vunpack.c.l.b16 %v2030
        %v2095 = vunpack.c.l.b16 %v2031
        %v2096 = vunpack.c.l.b16 %v2032
        %v2097 = vunpack.c.l.b16 %v2033
        %v2098 = vpack.c.b16 %v2067, %v2066
        %v2099 = vpack.c.b16 %v2069, %v2068
        %v2100 = vpack.c.b16 %v2071, %v2070
        %v2101 = vpack.c.b16 %v2073, %v2072
        %v2102 = vpack.c.b16 %v2075, %v2074
        %v2103 = vpack.c.b16 %v2077, %v2076
        %v2104 = vpack.c.b16 %v2079, %v2078
        %v2105 = vpack.c.b16 %v2081, %v2080
        %v2106 = vpack.c.b16 %v2083, %v2082
        %v2107 = vpack.c.b16 %v2085, %v2084
        %v2108 = vpack.c.b16 %v2087, %v2086
        %v2109 = vpack.c.b16 %v2089, %v2088
        %v2110 = vpack.c.b16 %v2091, %v2090
        %v2111 = vpack.c.b16 %v2093, %v2092
        %v2112 = vpack.c.b16 %v2095, %v2094
        %v2113 = vpack.c.b16 %v2097, %v2096
        %2114 = vrot.lane.b32.xlu0 %v2098, 24
        %v2115 = vpop.permute.xlu0 %2114
        %2116 = vrot.lane.b32.xlu0 %v2099, 24
        %v2117 = vpop.permute.xlu0 %2116
        %2118 = vrot.lane.b32.xlu0 %v2100, 24
        %v2119 = vpop.permute.xlu0 %2118
        %2120 = vrot.lane.b32.xlu0 %v2101, 24
        %v2121 = vpop.permute.xlu0 %2120
        %2122 = vrot.lane.b32.xlu0 %v2102, 24
        %v2123 = vpop.permute.xlu0 %2122
        %2124 = vrot.lane.b32.xlu0 %v2103, 24
        %v2125 = vpop.permute.xlu0 %2124
        %2126 = vrot.lane.b32.xlu0 %v2104, 24
        %v2127 = vpop.permute.xlu0 %2126
        %2128 = vrot.lane.b32.xlu0 %v2105, 24
        %v2129 = vpop.permute.xlu0 %2128
        %2130 = vrot.lane.b32.xlu0 %v2106, 24
        %v2131 = vpop.permute.xlu0 %2130
        %2132 = vrot.lane.b32.xlu0 %v2107, 24
        %v2133 = vpop.permute.xlu0 %2132
        %2134 = vrot.lane.b32.xlu0 %v2108, 24
        %v2135 = vpop.permute.xlu0 %2134
        %2136 = vrot.lane.b32.xlu0 %v2109, 24
        %v2137 = vpop.permute.xlu0 %2136
        %2138 = vrot.lane.b32.xlu0 %v2110, 24
        %v2139 = vpop.permute.xlu0 %2138
        %2140 = vrot.lane.b32.xlu0 %v2111, 24
        %v2141 = vpop.permute.xlu0 %2140
        %2142 = vrot.lane.b32.xlu0 %v2112, 24
        %v2143 = vpop.permute.xlu0 %2142
        %2144 = vrot.lane.b32.xlu0 %v2113, 24
        %v2145 = vpop.permute.xlu0 %2144
        %vm2162 = vcmask 228544
        %2163 = vst.msk [vmem:[#allocation2] sm:$0xff] %vm2162, %v2115
        %2164 = vst.msk [vmem:[#allocation2 + $0x8] sm:$0xff] %vm2162, %v2117
        %2165 = vst.msk [vmem:[#allocation2 + $0x10] sm:$0xff] %vm2162, %v2119
        %2166 = vst.msk [vmem:[#allocation2 + $0x18] sm:$0xff] %vm2162, %v2121
        %2167 = vst.msk [vmem:[#allocation2 + $0x20] sm:$0xff] %vm2162, %v2123
        %2168 = vst.msk [vmem:[#allocation2 + $0x28] sm:$0xff] %vm2162, %v2125
        %2169 = vst.msk [vmem:[#allocation2 + $0x30] sm:$0xff] %vm2162, %v2127
        %2170 = vst.msk [vmem:[#allocation2 + $0x38] sm:$0xff] %vm2162, %v2129
        %2171 = vst.msk [vmem:[#allocation2 + $0x40] sm:$0xff] %vm2162, %v2131
        %2172 = vst.msk [vmem:[#allocation2 + $0x48] sm:$0xff] %vm2162, %v2133
        %2173 = vst.msk [vmem:[#allocation2 + $0x50] sm:$0xff] %vm2162, %v2135
        %2174 = vst.msk [vmem:[#allocation2 + $0x58] sm:$0xff] %vm2162, %v2137
        %2175 = vst.msk [vmem:[#allocation2 + $0x60] sm:$0xff] %vm2162, %v2139
        %2176 = vst.msk [vmem:[#allocation2 + $0x68] sm:$0xff] %vm2162, %v2141
        %2177 = vst.msk [vmem:[#allocation2 + $0x70] sm:$0xff] %vm2162, %v2143
        %2178 = vst.msk [vmem:[#allocation2 + $0x78] sm:$0xff] %vm2162, %v2145
        %v2179 = vld [vmem:[%s2001] sm:$0xf]
        %v2180 = vld [vmem:[%s2001 + $0x4] sm:$0xf]
        %v2181 = vld [vmem:[%s2001 + $0x8] sm:$0x1]
        %v2182 = vld [vmem:[%s2001 + $0xc] sm:$0xf]
        %v2183 = vld [vmem:[%s2001 + $0x10] sm:$0xf]
        %v2184 = vld [vmem:[%s2001 + $0x14] sm:$0x1]
        %v2185 = vld [vmem:[%s2001 + $0x18] sm:$0xf]
        %v2186 = vld [vmem:[%s2001 + $0x1c] sm:$0xf]
        %v2187 = vld [vmem:[%s2001 + $0x20] sm:$0x1]
        %v2188 = vld [vmem:[%s2001 + $0x24] sm:$0xf]
        %v2189 = vld [vmem:[%s2001 + $0x28] sm:$0xf]
        %v2190 = vld [vmem:[%s2001 + $0x2c] sm:$0x1]
        %v2191 = vld [vmem:[%s2001 + $0x30] sm:$0xf]
        %v2192 = vld [vmem:[%s2001 + $0x34] sm:$0xf]
        %v2193 = vld [vmem:[%s2001 + $0x38] sm:$0x1]
        %v2194 = vld [vmem:[%s2001 + $0x3c] sm:$0xf]
        %v2195 = vld [vmem:[%s2001 + $0x40] sm:$0xf]
        %v2196 = vld [vmem:[%s2001 + $0x44] sm:$0x1]
        %v2197 = vld [vmem:[%s2001 + $0x48] sm:$0xf]
        %v2198 = vld [vmem:[%s2001 + $0x4c] sm:$0xf]
        %v2199 = vld [vmem:[%s2001 + $0x50] sm:$0x1]
        %v2200 = vld [vmem:[%s2001 + $0x54] sm:$0xf]
        %v2201 = vld [vmem:[%s2001 + $0x58] sm:$0xf]
        %v2202 = vld [vmem:[%s2001 + $0x5c] sm:$0x1]
        %v2203 = vld [vmem:[%s2001 + $0x60] sm:$0xf]
        %v2204 = vld [vmem:[%s2001 + $0x64] sm:$0xf]
        %v2205 = vld [vmem:[%s2001 + $0x68] sm:$0x1]
        %v2206 = vld [vmem:[%s2001 + $0x6c] sm:$0xf]
        %v2207 = vld [vmem:[%s2001 + $0x70] sm:$0xf]
        %v2208 = vld [vmem:[%s2001 + $0x74] sm:$0x1]
        %v2209 = vld [vmem:[%s2001 + $0x78] sm:$0xf]
        %v2210 = vld [vmem:[%s2001 + $0x7c] sm:$0xf]
        %v2211 = vld [vmem:[%s2001 + $0x80] sm:$0x1]
        %v2212 = vld [vmem:[%s2001 + $0x84] sm:$0xf]
        %v2213 = vld [vmem:[%s2001 + $0x88] sm:$0xf]
        %v2214 = vld [vmem:[%s2001 + $0x8c] sm:$0x1]
        %v2215 = vld [vmem:[%s2001 + $0x90] sm:$0xf]
        %v2216 = vld [vmem:[%s2001 + $0x94] sm:$0xf]
        %v2217 = vld [vmem:[%s2001 + $0x98] sm:$0x1]
        %v2218 = vld [vmem:[%s2001 + $0x9c] sm:$0xf]
        %v2219 = vld [vmem:[%s2001 + $0xa0] sm:$0xf]
        %v2220 = vld [vmem:[%s2001 + $0xa4] sm:$0x1]
        %v2221 = vld [vmem:[%s2001 + $0xa8] sm:$0xf]
        %v2222 = vld [vmem:[%s2001 + $0xac] sm:$0xf]
        %v2223 = vld [vmem:[%s2001 + $0xb0] sm:$0x1]
        %v2224 = vld [vmem:[%s2001 + $0xb4] sm:$0xf]
        %v2225 = vld [vmem:[%s2001 + $0xb8] sm:$0xf]
        %v2226 = vld [vmem:[%s2001 + $0xbc] sm:$0x1]
        %v2275 = vunpack.c.l.b16 %v2179
        %v2276 = vunpack.c.l.b16 %v2180
        %v2277 = vunpack.c.l.b16 %v2181
        %v2278 = vunpack.c.l.b16 %v2182
        %v2279 = vunpack.c.l.b16 %v2183
        %v2280 = vunpack.c.l.b16 %v2184
        %v2281 = vunpack.c.l.b16 %v2185
        %v2282 = vunpack.c.l.b16 %v2186
        %v2283 = vunpack.c.l.b16 %v2187
        %v2284 = vunpack.c.l.b16 %v2188
        %v2285 = vunpack.c.l.b16 %v2189
        %v2286 = vunpack.c.l.b16 %v2190
        %v2287 = vunpack.c.l.b16 %v2191
        %v2288 = vunpack.c.l.b16 %v2192
        %v2289 = vunpack.c.l.b16 %v2193
        %v2290 = vunpack.c.l.b16 %v2194
        %v2291 = vunpack.c.l.b16 %v2195
        %v2292 = vunpack.c.l.b16 %v2196
        %v2293 = vunpack.c.l.b16 %v2197
        %v2294 = vunpack.c.l.b16 %v2198
        %v2295 = vunpack.c.l.b16 %v2199
        %v2296 = vunpack.c.l.b16 %v2200
        %v2297 = vunpack.c.l.b16 %v2201
        %v2298 = vunpack.c.l.b16 %v2202
        %v2299 = vunpack.c.l.b16 %v2203
        %v2300 = vunpack.c.l.b16 %v2204
        %v2301 = vunpack.c.l.b16 %v2205
        %v2302 = vunpack.c.l.b16 %v2206
        %v2303 = vunpack.c.l.b16 %v2207
        %v2304 = vunpack.c.l.b16 %v2208
        %v2305 = vunpack.c.l.b16 %v2209
        %v2306 = vunpack.c.l.b16 %v2210
        %v2307 = vunpack.c.l.b16 %v2211
        %v2308 = vunpack.c.l.b16 %v2212
        %v2309 = vunpack.c.l.b16 %v2213
        %v2310 = vunpack.c.l.b16 %v2214
        %v2311 = vunpack.c.l.b16 %v2215
        %v2312 = vunpack.c.l.b16 %v2216
        %v2313 = vunpack.c.l.b16 %v2217
        %v2314 = vunpack.c.l.b16 %v2218
        %v2315 = vunpack.c.l.b16 %v2219
        %v2316 = vunpack.c.l.b16 %v2220
        %v2317 = vunpack.c.l.b16 %v2221
        %v2318 = vunpack.c.l.b16 %v2222
        %v2319 = vunpack.c.l.b16 %v2223
        %v2320 = vunpack.c.l.b16 %v2224
        %v2321 = vunpack.c.l.b16 %v2225
        %v2322 = vunpack.c.l.b16 %v2226
        %v2323 = vpack.c.b16 %v2276, %v2275
        %v2324 = vpack.c.b16 %v2277, %v2277
        %v2325 = vpack.c.b16 %v2279, %v2278
        %v2326 = vpack.c.b16 %v2280, %v2280
        %v2327 = vpack.c.b16 %v2282, %v2281
        %v2328 = vpack.c.b16 %v2283, %v2283
        %v2329 = vpack.c.b16 %v2285, %v2284
        %v2330 = vpack.c.b16 %v2286, %v2286
        %v2331 = vpack.c.b16 %v2288, %v2287
        %v2332 = vpack.c.b16 %v2289, %v2289
        %v2333 = vpack.c.b16 %v2291, %v2290
        %v2334 = vpack.c.b16 %v2292, %v2292
        %v2335 = vpack.c.b16 %v2294, %v2293
        %v2336 = vpack.c.b16 %v2295, %v2295
        %v2337 = vpack.c.b16 %v2297, %v2296
        %v2338 = vpack.c.b16 %v2298, %v2298
        %v2339 = vpack.c.b16 %v2300, %v2299
        %v2340 = vpack.c.b16 %v2301, %v2301
        %v2341 = vpack.c.b16 %v2303, %v2302
        %v2342 = vpack.c.b16 %v2304, %v2304
        %v2343 = vpack.c.b16 %v2306, %v2305
        %v2344 = vpack.c.b16 %v2307, %v2307
        %v2345 = vpack.c.b16 %v2309, %v2308
        %v2346 = vpack.c.b16 %v2310, %v2310
        %v2347 = vpack.c.b16 %v2312, %v2311
        %v2348 = vpack.c.b16 %v2313, %v2313
        %v2349 = vpack.c.b16 %v2315, %v2314
        %v2350 = vpack.c.b16 %v2316, %v2316
        %v2351 = vpack.c.b16 %v2318, %v2317
        %v2352 = vpack.c.b16 %v2319, %v2319
        %v2353 = vpack.c.b16 %v2321, %v2320
        %v2354 = vpack.c.b16 %v2322, %v2322
        %v2356 = vshrl.u32 %v2323, 16
        %v2358 = vshll.u32 %v2323, 16
        %v2360 = vrot.slane %v2358, 1
        %v2361 = vor.u32 %v2356, %v2360
        %v2363 = vshll.u32 %v2324, 16
        %v2365 = vrot.slane %v2363, 1
        %v2366 = vsel %vm553, %v2361, %v2365
        %v2368 = vshrl.u32 %v2325, 16
        %v2370 = vshll.u32 %v2325, 16
        %v2372 = vrot.slane %v2370, 1
        %v2373 = vor.u32 %v2368, %v2372
        %v2375 = vshll.u32 %v2326, 16
        %v2377 = vrot.slane %v2375, 1
        %v2378 = vsel %vm553, %v2373, %v2377
        %v2380 = vshrl.u32 %v2327, 16
        %v2382 = vshll.u32 %v2327, 16
        %v2384 = vrot.slane %v2382, 1
        %v2385 = vor.u32 %v2380, %v2384
        %v2387 = vshll.u32 %v2328, 16
        %v2389 = vrot.slane %v2387, 1
        %v2390 = vsel %vm553, %v2385, %v2389
        %v2392 = vshrl.u32 %v2329, 16
        %v2394 = vshll.u32 %v2329, 16
        %v2396 = vrot.slane %v2394, 1
        %v2397 = vor.u32 %v2392, %v2396
        %v2399 = vshll.u32 %v2330, 16
        %v2401 = vrot.slane %v2399, 1
        %v2402 = vsel %vm553, %v2397, %v2401
        %v2404 = vshrl.u32 %v2331, 16
        %v2406 = vshll.u32 %v2331, 16
        %v2408 = vrot.slane %v2406, 1
        %v2409 = vor.u32 %v2404, %v2408
        %v2411 = vshll.u32 %v2332, 16
        %v2413 = vrot.slane %v2411, 1
        %v2414 = vsel %vm553, %v2409, %v2413
        %v2416 = vshrl.u32 %v2333, 16
        %v2418 = vshll.u32 %v2333, 16
        %v2420 = vrot.slane %v2418, 1
        %v2421 = vor.u32 %v2416, %v2420
        %v2423 = vshll.u32 %v2334, 16
        %v2425 = vrot.slane %v2423, 1
        %v2426 = vsel %vm553, %v2421, %v2425
        %v2428 = vshrl.u32 %v2335, 16
        %v2430 = vshll.u32 %v2335, 16
        %v2432 = vrot.slane %v2430, 1
        %v2433 = vor.u32 %v2428, %v2432
        %v2435 = vshll.u32 %v2336, 16
        %v2437 = vrot.slane %v2435, 1
        %v2438 = vsel %vm553, %v2433, %v2437
        %v2440 = vshrl.u32 %v2337, 16
        %v2442 = vshll.u32 %v2337, 16
        %v2444 = vrot.slane %v2442, 1
        %v2445 = vor.u32 %v2440, %v2444
        %v2447 = vshll.u32 %v2338, 16
        %v2449 = vrot.slane %v2447, 1
        %v2450 = vsel %vm553, %v2445, %v2449
        %v2452 = vshrl.u32 %v2339, 16
        %v2454 = vshll.u32 %v2339, 16
        %v2456 = vrot.slane %v2454, 1
        %v2457 = vor.u32 %v2452, %v2456
        %v2459 = vshll.u32 %v2340, 16
        %v2461 = vrot.slane %v2459, 1
        %v2462 = vsel %vm553, %v2457, %v2461
        %v2464 = vshrl.u32 %v2341, 16
        %v2466 = vshll.u32 %v2341, 16
        %v2468 = vrot.slane %v2466, 1
        %v2469 = vor.u32 %v2464, %v2468
        %v2471 = vshll.u32 %v2342, 16
        %v2473 = vrot.slane %v2471, 1
        %v2474 = vsel %vm553, %v2469, %v2473
        %v2476 = vshrl.u32 %v2343, 16
        %v2478 = vshll.u32 %v2343, 16
        %v2480 = vrot.slane %v2478, 1
        %v2481 = vor.u32 %v2476, %v2480
        %v2483 = vshll.u32 %v2344, 16
        %v2485 = vrot.slane %v2483, 1
        %v2486 = vsel %vm553, %v2481, %v2485
        %v2488 = vshrl.u32 %v2345, 16
        %v2490 = vshll.u32 %v2345, 16
        %v2492 = vrot.slane %v2490, 1
        %v2493 = vor.u32 %v2488, %v2492
        %v2495 = vshll.u32 %v2346, 16
        %v2497 = vrot.slane %v2495, 1
        %v2498 = vsel %vm553, %v2493, %v2497
        %v2500 = vshrl.u32 %v2347, 16
        %v2502 = vshll.u32 %v2347, 16
        %v2504 = vrot.slane %v2502, 1
        %v2505 = vor.u32 %v2500, %v2504
        %v2507 = vshll.u32 %v2348, 16
        %v2509 = vrot.slane %v2507, 1
        %v2510 = vsel %vm553, %v2505, %v2509
        %v2512 = vshrl.u32 %v2349, 16
        %v2514 = vshll.u32 %v2349, 16
        %v2516 = vrot.slane %v2514, 1
        %v2517 = vor.u32 %v2512, %v2516
        %v2519 = vshll.u32 %v2350, 16
        %v2521 = vrot.slane %v2519, 1
        %v2522 = vsel %vm553, %v2517, %v2521
        %v2524 = vshrl.u32 %v2351, 16
        %v2526 = vshll.u32 %v2351, 16
        %v2528 = vrot.slane %v2526, 1
        %v2529 = vor.u32 %v2524, %v2528
        %v2531 = vshll.u32 %v2352, 16
        %v2533 = vrot.slane %v2531, 1
        %v2534 = vsel %vm553, %v2529, %v2533
        %v2536 = vshrl.u32 %v2353, 16
        %v2538 = vshll.u32 %v2353, 16
        %v2540 = vrot.slane %v2538, 1
        %v2541 = vor.u32 %v2536, %v2540
        %v2543 = vshll.u32 %v2354, 16
        %v2545 = vrot.slane %v2543, 1
        %v2546 = vsel %vm553, %v2541, %v2545
        %2547 = vrot.lane.b32.xlu0 %v2366, 28
        %v2548 = vpop.permute.xlu0 %2547
        %2549 = vrot.lane.b32.xlu0 %v2378, 28
        %v2550 = vpop.permute.xlu0 %2549
        %2551 = vrot.lane.b32.xlu0 %v2390, 28
        %v2552 = vpop.permute.xlu0 %2551
        %2553 = vrot.lane.b32.xlu0 %v2402, 28
        %v2554 = vpop.permute.xlu0 %2553
        %2555 = vrot.lane.b32.xlu0 %v2414, 28
        %v2556 = vpop.permute.xlu0 %2555
        %2557 = vrot.lane.b32.xlu0 %v2426, 28
        %v2558 = vpop.permute.xlu0 %2557
        %2559 = vrot.lane.b32.xlu0 %v2438, 28
        %v2560 = vpop.permute.xlu0 %2559
        %2561 = vrot.lane.b32.xlu0 %v2450, 28
        %v2562 = vpop.permute.xlu0 %2561
        %2563 = vrot.lane.b32.xlu0 %v2462, 28
        %v2564 = vpop.permute.xlu0 %2563
        %2565 = vrot.lane.b32.xlu0 %v2474, 28
        %v2566 = vpop.permute.xlu0 %2565
        %2567 = vrot.lane.b32.xlu0 %v2486, 28
        %v2568 = vpop.permute.xlu0 %2567
        %2569 = vrot.lane.b32.xlu0 %v2498, 28
        %v2570 = vpop.permute.xlu0 %2569
        %2571 = vrot.lane.b32.xlu0 %v2510, 28
        %v2572 = vpop.permute.xlu0 %2571
        %2573 = vrot.lane.b32.xlu0 %v2522, 28
        %v2574 = vpop.permute.xlu0 %2573
        %2575 = vrot.lane.b32.xlu0 %v2534, 28
        %v2576 = vpop.permute.xlu0 %2575
        %2577 = vrot.lane.b32.xlu0 %v2546, 28
        %v2578 = vpop.permute.xlu0 %2577
        %vm2595 = vcmask 261344
        %2596 = vst.msk [vmem:[#allocation2] sm:$0xff] %vm2595, %v2548
        %2597 = vst.msk [vmem:[#allocation2 + $0x8] sm:$0xff] %vm2595, %v2550
        %2598 = vst.msk [vmem:[#allocation2 + $0x10] sm:$0xff] %vm2595, %v2552
        %2599 = vst.msk [vmem:[#allocation2 + $0x18] sm:$0xff] %vm2595, %v2554
        %2600 = vst.msk [vmem:[#allocation2 + $0x20] sm:$0xff] %vm2595, %v2556
        %2601 = vst.msk [vmem:[#allocation2 + $0x28] sm:$0xff] %vm2595, %v2558
        %2602 = vst.msk [vmem:[#allocation2 + $0x30] sm:$0xff] %vm2595, %v2560
        %2603 = vst.msk [vmem:[#allocation2 + $0x38] sm:$0xff] %vm2595, %v2562
        %2604 = vst.msk [vmem:[#allocation2 + $0x40] sm:$0xff] %vm2595, %v2564
        %2605 = vst.msk [vmem:[#allocation2 + $0x48] sm:$0xff] %vm2595, %v2566
        %2606 = vst.msk [vmem:[#allocation2 + $0x50] sm:$0xff] %vm2595, %v2568
        %2607 = vst.msk [vmem:[#allocation2 + $0x58] sm:$0xff] %vm2595, %v2570
        %2608 = vst.msk [vmem:[#allocation2 + $0x60] sm:$0xff] %vm2595, %v2572
        %2609 = vst.msk [vmem:[#allocation2 + $0x68] sm:$0xff] %vm2595, %v2574
        %2610 = vst.msk [vmem:[#allocation2 + $0x70] sm:$0xff] %vm2595, %v2576
        %2611 = vst.msk [vmem:[#allocation2 + $0x78] sm:$0xff] %vm2595, %v2578
        %v2612 = vld [vmem:[%s2001] sm:$0xe]
        %v2613 = vld [vmem:[%s2001 + $0x4] sm:$0xf]
        %v2614 = vld [vmem:[%s2001 + $0x8] sm:$0x1]
        %v2615 = vld [vmem:[%s2001 + $0xc] sm:$0xe]
        %v2616 = vld [vmem:[%s2001 + $0x10] sm:$0xf]
        %v2617 = vld [vmem:[%s2001 + $0x14] sm:$0x1]
        %v2618 = vld [vmem:[%s2001 + $0x18] sm:$0xe]
        %v2619 = vld [vmem:[%s2001 + $0x1c] sm:$0xf]
        %v2620 = vld [vmem:[%s2001 + $0x20] sm:$0x1]
        %v2621 = vld [vmem:[%s2001 + $0x24] sm:$0xe]
        %v2622 = vld [vmem:[%s2001 + $0x28] sm:$0xf]
        %v2623 = vld [vmem:[%s2001 + $0x2c] sm:$0x1]
        %v2624 = vld [vmem:[%s2001 + $0x30] sm:$0xe]
        %v2625 = vld [vmem:[%s2001 + $0x34] sm:$0xf]
        %v2626 = vld [vmem:[%s2001 + $0x38] sm:$0x1]
        %v2627 = vld [vmem:[%s2001 + $0x3c] sm:$0xe]
        %v2628 = vld [vmem:[%s2001 + $0x40] sm:$0xf]
        %v2629 = vld [vmem:[%s2001 + $0x44] sm:$0x1]
        %v2630 = vld [vmem:[%s2001 + $0x48] sm:$0xe]
        %v2631 = vld [vmem:[%s2001 + $0x4c] sm:$0xf]
        %v2632 = vld [vmem:[%s2001 + $0x50] sm:$0x1]
        %v2633 = vld [vmem:[%s2001 + $0x54] sm:$0xe]
        %v2634 = vld [vmem:[%s2001 + $0x58] sm:$0xf]
        %v2635 = vld [vmem:[%s2001 + $0x5c] sm:$0x1]
        %v2636 = vld [vmem:[%s2001 + $0x60] sm:$0xe]
        %v2637 = vld [vmem:[%s2001 + $0x64] sm:$0xf]
        %v2638 = vld [vmem:[%s2001 + $0x68] sm:$0x1]
        %v2639 = vld [vmem:[%s2001 + $0x6c] sm:$0xe]
        %v2640 = vld [vmem:[%s2001 + $0x70] sm:$0xf]
        %v2641 = vld [vmem:[%s2001 + $0x74] sm:$0x1]
        %v2642 = vld [vmem:[%s2001 + $0x78] sm:$0xe]
        %v2643 = vld [vmem:[%s2001 + $0x7c] sm:$0xf]
        %v2644 = vld [vmem:[%s2001 + $0x80] sm:$0x1]
        %v2645 = vld [vmem:[%s2001 + $0x84] sm:$0xe]
        %v2646 = vld [vmem:[%s2001 + $0x88] sm:$0xf]
        %v2647 = vld [vmem:[%s2001 + $0x8c] sm:$0x1]
        %v2648 = vld [vmem:[%s2001 + $0x90] sm:$0xe]
        %v2649 = vld [vmem:[%s2001 + $0x94] sm:$0xf]
        %v2650 = vld [vmem:[%s2001 + $0x98] sm:$0x1]
        %v2651 = vld [vmem:[%s2001 + $0x9c] sm:$0xe]
        %v2652 = vld [vmem:[%s2001 + $0xa0] sm:$0xf]
        %v2653 = vld [vmem:[%s2001 + $0xa4] sm:$0x1]
        %v2654 = vld [vmem:[%s2001 + $0xa8] sm:$0xe]
        %v2655 = vld [vmem:[%s2001 + $0xac] sm:$0xf]
        %v2656 = vld [vmem:[%s2001 + $0xb0] sm:$0x1]
        %v2657 = vld [vmem:[%s2001 + $0xb4] sm:$0xe]
        %v2658 = vld [vmem:[%s2001 + $0xb8] sm:$0xf]
        %v2659 = vld [vmem:[%s2001 + $0xbc] sm:$0x1]
        %v2708 = vunpack.c.l.b16 %v2612
        %v2709 = vunpack.c.l.b16 %v2613
        %v2710 = vunpack.c.l.b16 %v2614
        %v2711 = vunpack.c.l.b16 %v2615
        %v2712 = vunpack.c.l.b16 %v2616
        %v2713 = vunpack.c.l.b16 %v2617
        %v2714 = vunpack.c.l.b16 %v2618
        %v2715 = vunpack.c.l.b16 %v2619
        %v2716 = vunpack.c.l.b16 %v2620
        %v2717 = vunpack.c.l.b16 %v2621
        %v2718 = vunpack.c.l.b16 %v2622
        %v2719 = vunpack.c.l.b16 %v2623
        %v2720 = vunpack.c.l.b16 %v2624
        %v2721 = vunpack.c.l.b16 %v2625
        %v2722 = vunpack.c.l.b16 %v2626
        %v2723 = vunpack.c.l.b16 %v2627
        %v2724 = vunpack.c.l.b16 %v2628
        %v2725 = vunpack.c.l.b16 %v2629
        %v2726 = vunpack.c.l.b16 %v2630
        %v2727 = vunpack.c.l.b16 %v2631
        %v2728 = vunpack.c.l.b16 %v2632
        %v2729 = vunpack.c.l.b16 %v2633
        %v2730 = vunpack.c.l.b16 %v2634
        %v2731 = vunpack.c.l.b16 %v2635
        %v2732 = vunpack.c.l.b16 %v2636
        %v2733 = vunpack.c.l.b16 %v2637
        %v2734 = vunpack.c.l.b16 %v2638
        %v2735 = vunpack.c.l.b16 %v2639
        %v2736 = vunpack.c.l.b16 %v2640
        %v2737 = vunpack.c.l.b16 %v2641
        %v2738 = vunpack.c.l.b16 %v2642
        %v2739 = vunpack.c.l.b16 %v2643
        %v2740 = vunpack.c.l.b16 %v2644
        %v2741 = vunpack.c.l.b16 %v2645
        %v2742 = vunpack.c.l.b16 %v2646
        %v2743 = vunpack.c.l.b16 %v2647
        %v2744 = vunpack.c.l.b16 %v2648
        %v2745 = vunpack.c.l.b16 %v2649
        %v2746 = vunpack.c.l.b16 %v2650
        %v2747 = vunpack.c.l.b16 %v2651
        %v2748 = vunpack.c.l.b16 %v2652
        %v2749 = vunpack.c.l.b16 %v2653
        %v2750 = vunpack.c.l.b16 %v2654
        %v2751 = vunpack.c.l.b16 %v2655
        %v2752 = vunpack.c.l.b16 %v2656
        %v2753 = vunpack.c.l.b16 %v2657
        %v2754 = vunpack.c.l.b16 %v2658
        %v2755 = vunpack.c.l.b16 %v2659
        %v2756 = vpack.c.b16 %v2709, %v2708
        %v2757 = vpack.c.b16 %v2710, %v2710
        %v2758 = vpack.c.b16 %v2712, %v2711
        %v2759 = vpack.c.b16 %v2713, %v2713
        %v2760 = vpack.c.b16 %v2715, %v2714
        %v2761 = vpack.c.b16 %v2716, %v2716
        %v2762 = vpack.c.b16 %v2718, %v2717
        %v2763 = vpack.c.b16 %v2719, %v2719
        %v2764 = vpack.c.b16 %v2721, %v2720
        %v2765 = vpack.c.b16 %v2722, %v2722
        %v2766 = vpack.c.b16 %v2724, %v2723
        %v2767 = vpack.c.b16 %v2725, %v2725
        %v2768 = vpack.c.b16 %v2727, %v2726
        %v2769 = vpack.c.b16 %v2728, %v2728
        %v2770 = vpack.c.b16 %v2730, %v2729
        %v2771 = vpack.c.b16 %v2731, %v2731
        %v2772 = vpack.c.b16 %v2733, %v2732
        %v2773 = vpack.c.b16 %v2734, %v2734
        %v2774 = vpack.c.b16 %v2736, %v2735
        %v2775 = vpack.c.b16 %v2737, %v2737
        %v2776 = vpack.c.b16 %v2739, %v2738
        %v2777 = vpack.c.b16 %v2740, %v2740
        %v2778 = vpack.c.b16 %v2742, %v2741
        %v2779 = vpack.c.b16 %v2743, %v2743
        %v2780 = vpack.c.b16 %v2745, %v2744
        %v2781 = vpack.c.b16 %v2746, %v2746
        %v2782 = vpack.c.b16 %v2748, %v2747
        %v2783 = vpack.c.b16 %v2749, %v2749
        %v2784 = vpack.c.b16 %v2751, %v2750
        %v2785 = vpack.c.b16 %v2752, %v2752
        %v2786 = vpack.c.b16 %v2754, %v2753
        %v2787 = vpack.c.b16 %v2755, %v2755
        %v2788 = vrot.slane %v2756, 1
        %v2789 = vrot.slane %v2757, 1
        %v2790 = vsel %vm987, %v2788, %v2789
        %v2791 = vrot.slane %v2758, 1
        %v2792 = vrot.slane %v2759, 1
        %v2793 = vsel %vm987, %v2791, %v2792
        %v2794 = vrot.slane %v2760, 1
        %v2795 = vrot.slane %v2761, 1
        %v2796 = vsel %vm987, %v2794, %v2795
        %v2797 = vrot.slane %v2762, 1
        %v2798 = vrot.slane %v2763, 1
        %v2799 = vsel %vm987, %v2797, %v2798
        %v2800 = vrot.slane %v2764, 1
        %v2801 = vrot.slane %v2765, 1
        %v2802 = vsel %vm987, %v2800, %v2801
        %v2803 = vrot.slane %v2766, 1
        %v2804 = vrot.slane %v2767, 1
        %v2805 = vsel %vm987, %v2803, %v2804
        %v2806 = vrot.slane %v2768, 1
        %v2807 = vrot.slane %v2769, 1
        %v2808 = vsel %vm987, %v2806, %v2807
        %v2809 = vrot.slane %v2770, 1
        %v2810 = vrot.slane %v2771, 1
        %v2811 = vsel %vm987, %v2809, %v2810
        %v2812 = vrot.slane %v2772, 1
        %v2813 = vrot.slane %v2773, 1
        %v2814 = vsel %vm987, %v2812, %v2813
        %v2815 = vrot.slane %v2774, 1
        %v2816 = vrot.slane %v2775, 1
        %v2817 = vsel %vm987, %v2815, %v2816
        %v2818 = vrot.slane %v2776, 1
        %v2819 = vrot.slane %v2777, 1
        %v2820 = vsel %vm987, %v2818, %v2819
        %v2821 = vrot.slane %v2778, 1
        %v2822 = vrot.slane %v2779, 1
        %v2823 = vsel %vm987, %v2821, %v2822
        %v2824 = vrot.slane %v2780, 1
        %v2825 = vrot.slane %v2781, 1
        %v2826 = vsel %vm987, %v2824, %v2825
        %v2827 = vrot.slane %v2782, 1
        %v2828 = vrot.slane %v2783, 1
        %v2829 = vsel %vm987, %v2827, %v2828
        %v2830 = vrot.slane %v2784, 1
        %v2831 = vrot.slane %v2785, 1
        %v2832 = vsel %vm987, %v2830, %v2831
        %v2833 = vrot.slane %v2786, 1
        %v2834 = vrot.slane %v2787, 1
        %v2835 = vsel %vm987, %v2833, %v2834
        %2836 = vrot.lane.b32.xlu0 %v2790, 32
        %v2837 = vpop.permute.xlu0 %2836
        %2838 = vrot.lane.b32.xlu0 %v2793, 32
        %v2839 = vpop.permute.xlu0 %2838
        %2840 = vrot.lane.b32.xlu0 %v2796, 32
        %v2841 = vpop.permute.xlu0 %2840
        %2842 = vrot.lane.b32.xlu0 %v2799, 32
        %v2843 = vpop.permute.xlu0 %2842
        %2844 = vrot.lane.b32.xlu0 %v2802, 32
        %v2845 = vpop.permute.xlu0 %2844
        %2846 = vrot.lane.b32.xlu0 %v2805, 32
        %v2847 = vpop.permute.xlu0 %2846
        %2848 = vrot.lane.b32.xlu0 %v2808, 32
        %v2849 = vpop.permute.xlu0 %2848
        %2850 = vrot.lane.b32.xlu0 %v2811, 32
        %v2851 = vpop.permute.xlu0 %2850
        %2852 = vrot.lane.b32.xlu0 %v2814, 32
        %v2853 = vpop.permute.xlu0 %2852
        %2854 = vrot.lane.b32.xlu0 %v2817, 32
        %v2855 = vpop.permute.xlu0 %2854
        %2856 = vrot.lane.b32.xlu0 %v2820, 32
        %v2857 = vpop.permute.xlu0 %2856
        %2858 = vrot.lane.b32.xlu0 %v2823, 32
        %v2859 = vpop.permute.xlu0 %2858
        %2860 = vrot.lane.b32.xlu0 %v2826, 32
        %v2861 = vpop.permute.xlu0 %2860
        %2862 = vrot.lane.b32.xlu0 %v2829, 32
        %v2863 = vpop.permute.xlu0 %2862
        %2864 = vrot.lane.b32.xlu0 %v2832, 32
        %v2865 = vpop.permute.xlu0 %2864
        %2866 = vrot.lane.b32.xlu0 %v2835, 32
        %v2867 = vpop.permute.xlu0 %2866
        %vm2884 = vcmask 294144
        %2885 = vst.msk [vmem:[#allocation2] sm:$0xff] %vm2884, %v2837
        %2886 = vst.msk [vmem:[#allocation2 + $0x8] sm:$0xff] %vm2884, %v2839
        %2887 = vst.msk [vmem:[#allocation2 + $0x10] sm:$0xff] %vm2884, %v2841
        %2888 = vst.msk [vmem:[#allocation2 + $0x18] sm:$0xff] %vm2884, %v2843
        %2889 = vst.msk [vmem:[#allocation2 + $0x20] sm:$0xff] %vm2884, %v2845
        %2890 = vst.msk [vmem:[#allocation2 + $0x28] sm:$0xff] %vm2884, %v2847
        %2891 = vst.msk [vmem:[#allocation2 + $0x30] sm:$0xff] %vm2884, %v2849
        %2892 = vst.msk [vmem:[#allocation2 + $0x38] sm:$0xff] %vm2884, %v2851
        %2893 = vst.msk [vmem:[#allocation2 + $0x40] sm:$0xff] %vm2884, %v2853
        %2894 = vst.msk [vmem:[#allocation2 + $0x48] sm:$0xff] %vm2884, %v2855
        %2895 = vst.msk [vmem:[#allocation2 + $0x50] sm:$0xff] %vm2884, %v2857
        %2896 = vst.msk [vmem:[#allocation2 + $0x58] sm:$0xff] %vm2884, %v2859
        %2897 = vst.msk [vmem:[#allocation2 + $0x60] sm:$0xff] %vm2884, %v2861
        %2898 = vst.msk [vmem:[#allocation2 + $0x68] sm:$0xff] %vm2884, %v2863
        %2899 = vst.msk [vmem:[#allocation2 + $0x70] sm:$0xff] %vm2884, %v2865
        %2900 = vst.msk [vmem:[#allocation2 + $0x78] sm:$0xff] %vm2884, %v2867
        %v2901 = vld [vmem:[#allocation2] sm:$0xff]
        %v2902 = vld [vmem:[#allocation2 + $0x8] sm:$0xff]
        %v2903 = vld [vmem:[#allocation2 + $0x10] sm:$0xff]
        %v2904 = vld [vmem:[#allocation2 + $0x18] sm:$0xff]
        %v2905 = vld [vmem:[#allocation2 + $0x20] sm:$0xff]
        %v2906 = vld [vmem:[#allocation2 + $0x28] sm:$0xff]
        %v2907 = vld [vmem:[#allocation2 + $0x30] sm:$0xff]
        %v2908 = vld [vmem:[#allocation2 + $0x38] sm:$0xff]
        %v2909 = vld [vmem:[#allocation2 + $0x40] sm:$0xff]
        %v2910 = vld [vmem:[#allocation2 + $0x48] sm:$0xff]
        %v2911 = vld [vmem:[#allocation2 + $0x50] sm:$0xff]
        %v2912 = vld [vmem:[#allocation2 + $0x58] sm:$0xff]
        %v2913 = vld [vmem:[#allocation2 + $0x60] sm:$0xff]
        %v2914 = vld [vmem:[#allocation2 + $0x68] sm:$0xff]
        %v2915 = vld [vmem:[#allocation2 + $0x70] sm:$0xff]
        %v2916 = vld [vmem:[#allocation2 + $0x78] sm:$0xff]
        %v2917 = vld [vmem:[%s226] sm:$0xf]
        %v2918 = vld [vmem:[%s226 + $0x4] sm:$0xf]
        %v2919 = vld [vmem:[%s226 + $0x8] sm:$0xf]
        %v2920 = vld [vmem:[%s226 + $0xc] sm:$0xf]
        %v2921 = vld [vmem:[%s226 + $0x10] sm:$0x3]
        %v2922 = vld [vmem:[%s229] sm:$0x1]
        %v2924 = vlaneseq
        %v2925 = vshrl.u32 %v2924, 7
        %v2926 = vsub.s32 0, %v2925
        %v2927 = vrot.slane %v2922, %v2926
        %v2934 = vunpack.c.l.b16 %v2917
        %v2935 = vunpack.c.l.b16 %v2918
        %v2936 = vunpack.c.l.b16 %v2919
        %v2937 = vunpack.c.l.b16 %v2920
        %v2938 = vunpack.c.l.b16 %v2921
        %v2939 = vpack.c.b16 %v2935, %v2934
        %v2940 = vpack.c.b16 %v2937, %v2936
        %v2941 = vpack.c.b16 %v2938, %v2938
        %vm2944 = vcmask 293888
        %v2946 = vsel %vm2944, %v2901, 0
        %v2949 = vsel %vm2944, %v2902, 0
        %v2952 = vsel %vm2944, %v2903, 0
        %v2955 = vsel %vm2944, %v2904, 0
        %v2958 = vsel %vm2944, %v2905, 0
        %v2961 = vsel %vm2944, %v2906, 0
        %v2964 = vsel %vm2944, %v2907, 0
        %v2967 = vsel %vm2944, %v2908, 0
        %v2970 = vsel %vm2944, %v2909, 0
        %v2973 = vsel %vm2944, %v2910, 0
        %v2976 = vsel %vm2944, %v2911, 0
        %v2979 = vsel %vm2944, %v2912, 0
        %v2982 = vsel %vm2944, %v2913, 0
        %v2985 = vsel %vm2944, %v2914, 0
        %v2988 = vsel %vm2944, %v2915, 0
        %v2991 = vsel %vm2944, %v2916, 0
        %vm2993 = vcmask 1041408
        %v2995 = vsel %vm2993, %v2941, 0
        %2997 = vmatprep.subr.bf16.mxu0 0
        %2998 = vmatpush1.bf16.msra.mxu0 %v2939
        %2999 = vmatprep.subr.bf16.mxu0 0
        %3000 = vmatpush1.bf16.msra.mxu0 %v2940
        %3001 = vmatprep.subr.bf16.mxu0 0
        %3002 = vmatpush1.bf16.msra.mxu0 %v2995
        %3003 = vmatprep.subr.bf16.mxu0 0
        %3004 = vmatpush1.bf16.msra.mxu0 0
        %3005 = vmatprep.subr.bf16.mxu0 0
        %3006 = vmatpush1.bf16.msra.mxu0 0
        %3007 = vmatprep.subr.bf16.mxu0 0
        %3008 = vmatpush1.bf16.msra.mxu0 0
        %3009 = vmatprep.subr.bf16.mxu0 0
        %3010 = vmatpush1.bf16.msra.mxu0 0
        %3011 = vmatprep.subr.bf16.mxu0 0
        %3012 = vmatpush1.bf16.msra.mxu0 0
        %3013 = vmatprep.subr.bf16.mxu0 0
        %3014 = vmatpush1.bf16.msra.mxu0 0
        %3015 = vmatprep.subr.bf16.mxu0 0
        %3016 = vmatpush1.bf16.msra.mxu0 0
        %3017 = vmatprep.subr.bf16.mxu0 0
        %3018 = vmatpush1.bf16.msra.mxu0 0
        %3019 = vmatprep.subr.bf16.mxu0 0
        %3020 = vmatpush1.bf16.msra.mxu0 0
        %3021 = vmatprep.subr.bf16.mxu0 0
        %3022 = vmatpush1.bf16.msra.mxu0 0
        %3023 = vmatprep.subr.bf16.mxu0 0
        %3024 = vmatpush1.bf16.msra.mxu0 0
        %3025 = vmatprep.subr.bf16.mxu0 0
        %3026 = vmatpush1.bf16.msra.mxu0 0
        %3027 = vmatprep.subr.bf16.mxu0 0
        %3028 = vmatpush1.bf16.msra.mxu0 0
        %3029 = vmatprep.mubr.bf16.mxu0 0
        %3030 = vmatmul.mubr.bf16.gmra.mrb[0].mxu0 %v2946
        %v3031 = vpop.f32.mrb[0].mxu0
        %v3032 = vadd.f32 %v2927, %v3031
        %v3033 = vpop.f32.mrb[0].mxu0
        %v3034 = vpop.f32.mrb[0].mxu0
        %v3035 = vadd.f32 %v2927, %v3034
        %v3036 = vpop.f32.mrb[0].mxu0
        %3037 = vmatprep.mubr.bf16.mxu0 0
        %3038 = vmatmul.mubr.bf16.gmra.mrb[0].mxu0 %v2949
        %v3039 = vpop.f32.mrb[0].mxu0
        %v3040 = vadd.f32 %v2927, %v3039
        %v3041 = vpop.f32.mrb[0].mxu0
        %v3042 = vpop.f32.mrb[0].mxu0
        %v3043 = vadd.f32 %v2927, %v3042
        %v3044 = vpop.f32.mrb[0].mxu0
        %3045 = vmatprep.mubr.bf16.mxu0 0
        %3046 = vmatmul.mubr.bf16.gmra.mrb[0].mxu0 %v2952
        %v3047 = vpop.f32.mrb[0].mxu0
        %v3048 = vadd.f32 %v2927, %v3047
        %v3049 = vpop.f32.mrb[0].mxu0
        %v3050 = vpop.f32.mrb[0].mxu0
        %v3051 = vadd.f32 %v2927, %v3050
        %v3052 = vpop.f32.mrb[0].mxu0
        %3053 = vmatprep.mubr.bf16.mxu0 0
        %3054 = vmatmul.mubr.bf16.gmra.mrb[0].mxu0 %v2955
        %v3055 = vpop.f32.mrb[0].mxu0
        %v3056 = vadd.f32 %v2927, %v3055
        %v3057 = vpop.f32.mrb[0].mxu0
        %v3058 = vpop.f32.mrb[0].mxu0
        %v3059 = vadd.f32 %v2927, %v3058
        %v3060 = vpop.f32.mrb[0].mxu0
        %3061 = vmatprep.mubr.bf16.mxu0 0
        %3062 = vmatmul.mubr.bf16.gmra.mrb[0].mxu0 %v2958
        %v3063 = vpop.f32.mrb[0].mxu0
        %v3064 = vadd.f32 %v2927, %v3063
        %v3065 = vpop.f32.mrb[0].mxu0
        %v3066 = vpop.f32.mrb[0].mxu0
        %v3067 = vadd.f32 %v2927, %v3066
        %v3068 = vpop.f32.mrb[0].mxu0
        %3069 = vmatprep.mubr.bf16.mxu0 0
        %3070 = vmatmul.mubr.bf16.gmra.mrb[0].mxu0 %v2961
        %v3071 = vpop.f32.mrb[0].mxu0
        %v3072 = vadd.f32 %v2927, %v3071
        %v3073 = vpop.f32.mrb[0].mxu0
        %v3074 = vpop.f32.mrb[0].mxu0
        %v3075 = vadd.f32 %v2927, %v3074
        %v3076 = vpop.f32.mrb[0].mxu0
        %3077 = vmatprep.mubr.bf16.mxu0 0
        %3078 = vmatmul.mubr.bf16.gmra.mrb[0].mxu0 %v2964
        %v3079 = vpop.f32.mrb[0].mxu0
        %v3080 = vadd.f32 %v2927, %v3079
        %v3081 = vpop.f32.mrb[0].mxu0
        %v3082 = vpop.f32.mrb[0].mxu0
        %v3083 = vadd.f32 %v2927, %v3082
        %v3084 = vpop.f32.mrb[0].mxu0
        %3085 = vmatprep.mubr.bf16.mxu0 0
        %3086 = vmatmul.mubr.bf16.gmra.mrb[0].mxu0 %v2967
        %v3087 = vpop.f32.mrb[0].mxu0
        %v3088 = vadd.f32 %v2927, %v3087
        %v3089 = vpop.f32.mrb[0].mxu0
        %v3090 = vpop.f32.mrb[0].mxu0
        %v3091 = vadd.f32 %v2927, %v3090
        %v3092 = vpop.f32.mrb[0].mxu0
        %3093 = vmatprep.mubr.bf16.mxu0 0
        %3094 = vmatmul.mubr.bf16.gmra.mrb[0].mxu0 %v2970
        %v3095 = vpop.f32.mrb[0].mxu0
        %v3096 = vadd.f32 %v2927, %v3095
        %v3097 = vpop.f32.mrb[0].mxu0
        %v3098 = vpop.f32.mrb[0].mxu0
        %v3099 = vadd.f32 %v2927, %v3098
        %v3100 = vpop.f32.mrb[0].mxu0
        %3101 = vmatprep.mubr.bf16.mxu0 0
        %3102 = vmatmul.mubr.bf16.gmra.mrb[0].mxu0 %v2973
        %v3103 = vpop.f32.mrb[0].mxu0
        %v3104 = vadd.f32 %v2927, %v3103
        %v3105 = vpop.f32.mrb[0].mxu0
        %v3106 = vpop.f32.mrb[0].mxu0
        %v3107 = vadd.f32 %v2927, %v3106
        %v3108 = vpop.f32.mrb[0].mxu0
        %3109 = vmatprep.mubr.bf16.mxu0 0
        %3110 = vmatmul.mubr.bf16.gmra.mrb[0].mxu0 %v2976
        %v3111 = vpop.f32.mrb[0].mxu0
        %v3112 = vadd.f32 %v2927, %v3111
        %v3113 = vpop.f32.mrb[0].mxu0
        %v3114 = vpop.f32.mrb[0].mxu0
        %v3115 = vadd.f32 %v2927, %v3114
        %v3116 = vpop.f32.mrb[0].mxu0
        %3117 = vmatprep.mubr.bf16.mxu0 0
        %3118 = vmatmul.mubr.bf16.gmra.mrb[0].mxu0 %v2979
        %v3119 = vpop.f32.mrb[0].mxu0
        %v3120 = vadd.f32 %v2927, %v3119
        %v3121 = vpop.f32.mrb[0].mxu0
        %v3122 = vpop.f32.mrb[0].mxu0
        %v3123 = vadd.f32 %v2927, %v3122
        %v3124 = vpop.f32.mrb[0].mxu0
        %3125 = vmatprep.mubr.bf16.mxu0 0
        %3126 = vmatmul.mubr.bf16.gmra.mrb[0].mxu0 %v2982
        %v3127 = vpop.f32.mrb[0].mxu0
        %v3128 = vadd.f32 %v2927, %v3127
        %v3129 = vpop.f32.mrb[0].mxu0
        %v3130 = vpop.f32.mrb[0].mxu0
        %v3131 = vadd.f32 %v2927, %v3130
        %v3132 = vpop.f32.mrb[0].mxu0
        %3133 = vmatprep.mubr.bf16.mxu0 0
        %3134 = vmatmul.mubr.bf16.gmra.mrb[0].mxu0 %v2985
        %v3135 = vpop.f32.mrb[0].mxu0
        %v3136 = vadd.f32 %v2927, %v3135
        %v3137 = vpop.f32.mrb[0].mxu0
        %v3138 = vpop.f32.mrb[0].mxu0
        %v3139 = vadd.f32 %v2927, %v3138
        %v3140 = vpop.f32.mrb[0].mxu0
        %3141 = vmatprep.mubr.bf16.mxu0 0
        %3142 = vmatmul.mubr.bf16.gmra.mrb[0].mxu0 %v2988
        %v3143 = vpop.f32.mrb[0].mxu0
        %v3144 = vadd.f32 %v2927, %v3143
        %v3145 = vpop.f32.mrb[0].mxu0
        %v3146 = vpop.f32.mrb[0].mxu0
        %v3147 = vadd.f32 %v2927, %v3146
        %v3148 = vpop.f32.mrb[0].mxu0
        %3149 = vmatprep.mubr.bf16.mxu0 0
        %3150 = vmatmul.mubr.bf16.gmra.mrb[0].mxu0 %v2991
        %v3151 = vpop.f32.mrb[0].mxu0
        %v3152 = vadd.f32 %v2927, %v3151
        %v3153 = vpop.f32.mrb[0].mxu0
        %v3154 = vpop.f32.mrb[0].mxu0
        %v3155 = vadd.f32 %v2927, %v3154
        %v3156 = vpop.f32.mrb[0].mxu0
        %3157 = vdwg.mxu0
        %3158 = vst [vmem:[%s215] sm:$0xff] %v3032
        %3159 = vst [vmem:[%s215 + $0x8] sm:$0xff] %v3035
        %3160 = vst [vmem:[%s215 + $0x10] sm:$0xff] %v3040
        %3161 = vst [vmem:[%s215 + $0x18] sm:$0xff] %v3043
        %3162 = vst [vmem:[%s215 + $0x20] sm:$0xff] %v3048
        %3163 = vst [vmem:[%s215 + $0x28] sm:$0xff] %v3051
        %3164 = vst [vmem:[%s215 + $0x30] sm:$0xff] %v3056
        %3165 = vst [vmem:[%s215 + $0x38] sm:$0xff] %v3059
        %3166 = vst [vmem:[%s215 + $0x40] sm:$0xff] %v3064
        %3167 = vst [vmem:[%s215 + $0x48] sm:$0xff] %v3067
        %3168 = vst [vmem:[%s215 + $0x50] sm:$0xff] %v3072
        %3169 = vst [vmem:[%s215 + $0x58] sm:$0xff] %v3075
        %3170 = vst [vmem:[%s215 + $0x60] sm:$0xff] %v3080
        %3171 = vst [vmem:[%s215 + $0x68] sm:$0xff] %v3083
        %3172 = vst [vmem:[%s215 + $0x70] sm:$0xff] %v3088
        %3173 = vst [vmem:[%s215 + $0x78] sm:$0xff] %v3091
        %3174 = vst [vmem:[%s215 + $0x80] sm:$0xff] %v3096
        %3175 = vst [vmem:[%s215 + $0x88] sm:$0xff] %v3099
        %3176 = vst [vmem:[%s215 + $0x90] sm:$0xff] %v3104
        %3177 = vst [vmem:[%s215 + $0x98] sm:$0xff] %v3107
        %3178 = vst [vmem:[%s215 + $0xa0] sm:$0xff] %v3112
        %3179 = vst [vmem:[%s215 + $0xa8] sm:$0xff] %v3115
        %3180 = vst [vmem:[%s215 + $0xb0] sm:$0xff] %v3120
        %3181 = vst [vmem:[%s215 + $0xb8] sm:$0xff] %v3123
        %3182 = vst [vmem:[%s215 + $0xc0] sm:$0xff] %v3128
        %3183 = vst [vmem:[%s215 + $0xc8] sm:$0xff] %v3131
        %3184 = vst [vmem:[%s215 + $0xd0] sm:$0xff] %v3136
        %3185 = vst [vmem:[%s215 + $0xd8] sm:$0xff] %v3139
        %3186 = vst [vmem:[%s215 + $0xe0] sm:$0xff] %v3144
        %3187 = vst [vmem:[%s215 + $0xe8] sm:$0xff] %v3147
        %3188 = vst [vmem:[%s215 + $0xf0] sm:$0xff] %v3152
        %3189 = vst [vmem:[%s215 + $0xf8] sm:$0xff] %v3155
        %s3190 = sand.u32 %s128, 1
        %s3191 = scalar_lea.sflag [#allocation4], %s3190
        %s3192 = sand.u32 %s128, 1
        %s3193 = smul.addr %s3192, 256
        %s3194 = scalar_lea.vmem [#allocation3], %s3193
        // Predicated region
        $region33: #{tpu_custom_call.1} parent=31 // pred_check
          %p3195 = pneg %p138
        $region34: #{tpu_custom_call.1} parent=31 // pred_check_branch
          %3197 = sbr.rel (%p3195) target = $region36
        $region35: #{tpu_custom_call.1} parent=31 // pred_region
          %s3198 = sadd.s32 %s22, %s24
          %s3200 = ssub.s32 4096, 4096
          %3201 = vsyncadd %s3191, %s3200
          %s3202 = smul.addr %s3198, 32
          %s3203 = sadd.s32 %s23, %s3202
          %s3204 = smul.addr %s3203, 128
          %s3205 = scalar_lea.hbm %s3, %s3204
          %s3206 = sshll.u32 %s3194, 4
          %s3207 = int_to_ptr.vmem [resolvable:$true] %s3206
          %3212 = dma.vmem_to_hbm [thread:$0]  %s3207, 4096, %s3205, %s3191, 128, 128, 8
        $region36: #{tpu_custom_call.1} parent=31 // pred_fallthru
          _
      $region32: #{tpu_custom_call.1} parent=5 // pred_fallthru
        _
      %p3213 = scmp.le.s32.totalorder 2, %s12
      // Predicated region
      $region37: #{tpu_custom_call.1} parent=5 // pred_check
        %p3214 = pneg %p3213
      $region38: #{tpu_custom_call.1} parent=5 // pred_check_branch
        %3216 = sbr.rel (%p3214) target = $region40
      $region39: #{tpu_custom_call.1} parent=5 // pred_region
        %s3217 = ssub.s32 %s12, 2
        // Predicated region
        $region41: #{tpu_custom_call.1} parent=39 // pred_check
          %p3218 = pneg %p144
        $region42: #{tpu_custom_call.1} parent=39 // pred_check_branch
          %3220 = sbr.rel (%p3218) target = $region44
        $region43: #{tpu_custom_call.1} parent=39 // pred_region
          %s3221 = sand.u32 %s129, 1
          %s3222 = scalar_lea.sflag [#allocation4], %s3221
          %s3223 = sand.u32 %s129, 1
          %s3224 = smul.addr %s3223, 256
          %s3225 = scalar_lea.vmem [#allocation3], %s3224
          %3226 = dma.done %s3222, 4096
        $region44: #{tpu_custom_call.1} parent=39 // pred_fallthru
          _
      $region40: #{tpu_custom_call.1} parent=5 // pred_fallthru
        _
    $region6: #{tpu_custom_call.1} parent=1 // loop_footer
      %s16 = sadd.s32 1, %s12
    $region7: #{tpu_custom_call.1} parent=1 // loop_footer_branch
      %11 = sbr.rel target = $region3
    $region8: #{tpu_custom_call.1} parent=1 // loop_exit
      _
    %3227 = vsyncpa [#allocation4], 1
    %s3228 = scalar_lea.sflag [#allocation4], 1
    %3229 = vsyncpa %s3228, 1

</llo_original>
